<compile_context>
chip_gen: v7x
topology: tpu7x:2x2x1
jax: 0.10.0
libtpu: 0.0.40
codegen_flags: <defaults>
</compile_context>

<pallas_src>
import functools

import jax
import jax.numpy as jnp
from jax.experimental import pallas as pl
from jax.experimental.pallas import tpu as pltpu

BN_EPS = 1e-3


# ------------------------- Pallas kernel (hot path) -------------------------

def _fused_matmul_kernel(x_ref, w_ref, b_ref, o_ref, *, relu):
    y = jnp.dot(x_ref[...], w_ref[...], preferred_element_type=jnp.float32)
    y = y + b_ref[...]
    if relu:
        y = jnp.maximum(y, 0.0)
    o_ref[...] = y.astype(o_ref.dtype)


def fused_matmul_bias(x, w, bias, *, relu, out_dtype=jnp.float32, tm=256):
    """out = maybe_relu(x @ w + bias); bias is per output column.

    Single-pass over K (full-K / full-N blocks, no padding); grid only over M.
    """
    M, K = x.shape
    Kw, N = w.shape
    assert K == Kw
    x = x.astype(jnp.bfloat16)
    w = w.astype(jnp.bfloat16)
    bias2 = bias.reshape(1, N).astype(jnp.float32)

    if M <= tm:
        bm, grid_m = M, 1          # full-extent M block: no divisibility constraint
    else:
        bm, grid_m = tm, pl.cdiv(M, tm)

    return pl.pallas_call(
        functools.partial(_fused_matmul_kernel, relu=relu),
        out_shape=jax.ShapeDtypeStruct((M, N), out_dtype),
        grid_spec=pltpu.PrefetchScalarGridSpec(
            num_scalar_prefetch=0,
            grid=(grid_m,),
            in_specs=[
                pl.BlockSpec((bm, K), lambda i: (i, 0)),   # X tile (full K)
                pl.BlockSpec((K, N), lambda i: (0, 0)),    # whole weight
                pl.BlockSpec((1, N), lambda i: (0, 0)),    # whole bias row
            ],
            out_specs=pl.BlockSpec((bm, N), lambda i: (i, 0)),
        ),
        compiler_params=pltpu.CompilerParams(
            dimension_semantics=("parallel",)),
    )(x, w, bias2)


# --------------------- one-time parameter preprocessing ----------------------

def _bn_fold(bn):
    scale = bn["gamma"] / jnp.sqrt(bn["var"] + BN_EPS)
    bias = bn["beta"] - bn["mean"] * scale
    return scale, bias


def prepare_rpn_params(params):
    """Fold BN into weights/bias, convert to matmul-ready (K, Cout) bf16 layout."""
    prep = {}
    for b in range(3):
        layers = []
        for layer in params[f"block{b + 1}"]:
            w = layer["w"]                       # (Cout, Cin, 3, 3) PyTorch OIHW
            cout = w.shape[0]
            w2 = jnp.transpose(w, (2, 3, 1, 0)).reshape(-1, cout)   # (9*Cin, Cout)
            scale, bias = _bn_fold(layer["bn"])
            layers.append(dict(w=(w2 * scale[None, :]).astype(jnp.bfloat16),
                               b=bias.astype(jnp.float32),
                               stride=layer["stride"], cout=cout))
        prep[f"block{b + 1}"] = layers

        d = params[f"deconv{b + 1}"]
        s = d["stride"]
        w = d["w"]                               # (Cin, Cout, s, s) ConvTranspose layout
        cin, cout = w.shape[0], w.shape[1]
        w2 = jnp.transpose(w, (0, 2, 3, 1)).reshape(cin, s * s * cout)
        scale, bias = _bn_fold(d["bn"])
        scale_t = jnp.tile(scale, s * s)
        bias_t = jnp.tile(bias, s * s)
        prep[f"deconv{b + 1}"] = dict(w=(w2 * scale_t[None, :]).astype(jnp.bfloat16),
                                      b=bias_t.astype(jnp.float32),
                                      stride=s, cout=cout)

    # Fuse the three 1x1 heads into one matmul: concat weight/bias columns.
    hw, hb, sizes = [], [], []
    for name in ("conv_box", "conv_cls", "conv_dir_cls"):
        w = params[name]["w"]                    # (Cout, Cin, 1, 1)
        cout = w.shape[0]
        hw.append(w.reshape(cout, -1).T)         # (Cin, Cout)
        hb.append(params[name]["b"])
        sizes.append(cout)
    prep["heads"] = dict(w=jnp.concatenate(hw, axis=1).astype(jnp.bfloat16),
                         b=jnp.concatenate(hb).astype(jnp.float32),
                         sizes=tuple(sizes))
    return prep


# ----------------------------- layer wrappers -------------------------------

def conv3x3_bn_relu(x, layer):
    """x: (N,H,W,Cin) NHWC bf16; pad=1, kernel=3."""
    # TODO(synk): at production spatial sizes the 9x im2col blow-up should be folded
    # into the kernel (taps as an in-kernel K loop) to cut conv input DMA ~9x.
    n, h, wd, cin = x.shape
    stride = layer["stride"]
    xp = jnp.pad(x, ((0, 0), (1, 1), (1, 1), (0, 0)))
    ho = (h + 2 - 3) // stride + 1
    wo = (wd + 2 - 3) // stride + 1
    taps = []
    for dh in range(3):
        for dw in range(3):
            taps.append(xp[:, dh:dh + (ho - 1) * stride + 1:stride,
                            dw:dw + (wo - 1) * stride + 1:stride, :])
    patches = jnp.concatenate(taps, axis=-1).reshape(n * ho * wo, 9 * cin)
    y = fused_matmul_bias(patches, layer["w"], layer["b"], relu=True,
                          out_dtype=jnp.bfloat16)
    return y.reshape(n, ho, wo, layer["cout"])


def deconv_bn_relu(x, d):
    """ConvTranspose2d with kernel_size == stride == s (no overlap)."""
    n, h, wd, cin = x.shape
    s, cout = d["stride"], d["cout"]
    y = fused_matmul_bias(x.reshape(n * h * wd, cin), d["w"], d["b"], relu=True,
                          out_dtype=jnp.bfloat16)
    if s == 1:
        return y.reshape(n, h, wd, cout)
    y = y.reshape(n, h, wd, s, s, cout).transpose(0, 1, 3, 2, 4, 5)
    return y.reshape(n, h * s, wd * s, cout)


def fused_heads(cat, hp):
    """Three 1x1 conv heads as a single matmul; output sliced per head (f32, NHWC)."""
    n, h, wd, c = cat.shape
    y = fused_matmul_bias(cat.reshape(n * h * wd, c), hp["w"], hp["b"], relu=False,
                          out_dtype=jnp.float32)
    y = y.reshape(n, h, wd, -1)
    s0, s1, s2 = hp["sizes"]
    box = y[..., :s0]
    cls = y[..., s0:s0 + s1]
    dircls = y[..., s0 + s1:s0 + s1 + s2]
    return box, cls, dircls


# ------------------------------ RPN module ----------------------------------

def _init_bn(key, c):
    k1, k2, k3, k4 = jax.random.split(key, 4)
    return dict(gamma=1.0 + 0.1 * jax.random.normal(k1, (c,), jnp.float32),
                beta=0.1 * jax.random.normal(k2, (c,), jnp.float32),
                mean=0.1 * jax.random.normal(k3, (c,), jnp.float32),
                var=0.5 + jnp.abs(jax.random.normal(k4, (c,), jnp.float32)))


def init_rpn_params(key, *, num_class=2, layer_nums=(1, 1, 1),
                    layer_strides=(2, 2, 2), num_filters=(32, 32, 64),
                    upsample_strides=(1, 2, 4),
                    num_upsample_filters=(32, 32, 32),
                    num_input_features=32, num_anchor_per_loc=2,
                    box_code_size=7, num_direction_bins=2):
    keys = iter(jax.random.split(key, 128))
    params = {}

    def conv_w(cout, cin, k=3):
        return 0.1 * jax.random.normal(next(keys), (cout, cin, k, k), jnp.float32)

    block_in = [num_input_features, num_filters[0], num_filters[1]]
    for b in range(3):
        cin, cout = block_in[b], num_filters[b]
        layers = [dict(w=conv_w(cout, cin), bn=_init_bn(next(keys), cout),
                       stride=layer_strides[b])]
        for _ in range(layer_nums[b]):
            layers.append(dict(w=conv_w(cout, cout),
                               bn=_init_bn(next(keys), cout), stride=1))
        params[f"block{b + 1}"] = layers
        u = int(upsample_strides[b])
        params[f"deconv{b + 1}"] = dict(
            w=0.1 * jax.random.normal(next(keys),
                                      (cout, num_upsample_filters[b], u, u),
                                      jnp.float32),
            bn=_init_bn(next(keys), num_upsample_filters[b]),
            stride=u)

    c_cat = sum(num_upsample_filters)
    num_cls = num_anchor_per_loc * num_class  # encode_background_as_zeros=True

    def head_p(cout):
        return dict(w=0.1 * jax.random.normal(next(keys), (cout, c_cat, 1, 1),
                                              jnp.float32),
                    b=0.1 * jax.random.normal(next(keys), (cout,), jnp.float32))

    params["conv_cls"] = head_p(num_cls)
    params["conv_box"] = head_p(num_anchor_per_loc * box_code_size)
    params["conv_dir_cls"] = head_p(num_anchor_per_loc * num_direction_bins)
    return params


def rpn_forward(prep, x_nchw):
    x = jnp.transpose(x_nchw, (0, 2, 3, 1)).astype(jnp.bfloat16)  # NCHW -> NHWC, bf16
    ups = []
    for b in range(3):
        for layer in prep[f"block{b + 1}"]:
            x = conv3x3_bn_relu(x, layer)
        ups.append(deconv_bn_relu(x, prep[f"deconv{b + 1}"]))
    cat = jnp.concatenate(ups, axis=-1)  # torch.cat(dim=1) in NHWC layout

    box_preds, cls_preds, dir_preds = fused_heads(cat, prep["heads"])
    ret = {"box_preds": box_preds, "cls_preds": cls_preds,
           "dir_cls_preds": dir_preds}  # already NHWC (== torch permute(0,2,3,1))
    # TODO(synk): `_use_rc_net` is read but never set in the reference __init__;
    # treated as False (no conv_rc head).
    return ret


# ---------------------------------- main -------------------------------------

if __name__ == "__main__":
    key = jax.random.PRNGKey(0)
    kp, kx = jax.random.split(key)
    params = init_rpn_params(kp)
    prep = prepare_rpn_params(params)  # one-time weight re-layout + BN fold
    # PyTorch-style NCHW input: batch=2, channels=num_input_features=32, 16x16.
    x = jax.random.normal(kx, (2, 32, 16, 16), jnp.float32)

    fwd = jax.jit(functools.partial(rpn_forward, prep))
    out = fwd(x)
    jax.block_until_ready(out)

    # shapes match torch outputs after .permute(0, 2, 3, 1)
    assert out["box_preds"].shape == (2, 8, 8, 2 * 7)
    assert out["cls_preds"].shape == (2, 8, 8, 2 * 2)
    assert out["dir_cls_preds"].shape == (2, 8, 8, 2 * 2)
    print("KERNEL_OK")
</pallas_src>

<mosaic_0001>
module attributes {stable_mosaic.version = 11 : i64} {
  func.func @_fused_matmul_kernel(%arg0: i32, %arg1: memref<128x288xbf16, #tpu.memory_space<vmem>>, %arg2: memref<288x32xbf16, #tpu.memory_space<vmem>>, %arg3: memref<1x32xf32, #tpu.memory_space<vmem>>, %arg4: memref<128x32xbf16, #tpu.memory_space<vmem>>) attributes {dimension_semantics = [#tpu.dimension_semantics<parallel>], iteration_bounds = array<i64: 1>, scalar_prefetch = 0 : i64, scratch_operands = 0 : i64, tpu.core_type = #tpu.core_type<tc>, window_params = [{transform_indices = @transform_0, window_bounds = array<i64: 128, 288>}, {pipeline_mode = #tpu.pipeline_mode<synchronous>, transform_indices = @transform_1, window_bounds = array<i64: 288, 32>}, {pipeline_mode = #tpu.pipeline_mode<synchronous>, transform_indices = @transform_2, window_bounds = array<i64: 1, 32>}, {transform_indices = @transform_3, window_bounds = array<i64: 128, 32>}]} {
    %c0 = arith.constant 0 : index
    %c0_0 = arith.constant 0 : index
    %0 = vector.load %arg1[%c0, %c0_0] : memref<128x288xbf16, #tpu.memory_space<vmem>>, vector<128x288xbf16>
    %c0_1 = arith.constant 0 : index
    %c0_2 = arith.constant 0 : index
    %1 = vector.load %arg2[%c0_1, %c0_2] : memref<288x32xbf16, #tpu.memory_space<vmem>>, vector<288x32xbf16>
    %cst = arith.constant dense<0.000000e+00> : vector<128x32xf32>
    %2 = tpu.matmul %0, %1, %cst {dimension_numbers = #tpu.dot_dimension_numbers<[1], [0], [0], [1], [0, 0, 1, 1], [], []>} : vector<128x288xbf16>, vector<288x32xbf16>, vector<128x32xf32> -> vector<128x32xf32>
    %c0_3 = arith.constant 0 : index
    %c0_4 = arith.constant 0 : index
    %3 = vector.load %arg3[%c0_3, %c0_4] : memref<1x32xf32, #tpu.memory_space<vmem>>, vector<1x32xf32>
    %4 = vector.broadcast %3 : vector<1x32xf32> to vector<128x32xf32>
    %5 = arith.addf %2, %4 : vector<128x32xf32>
    %cst_5 = arith.constant 0.000000e+00 : f32
    %6 = vector.broadcast %cst_5 : f32 to vector<128x32xf32>
    %7 = arith.maximumf %5, %6 : vector<128x32xf32>
    %8 = arith.truncf %7 : vector<128x32xf32> to vector<128x32xbf16>
    %c0_6 = arith.constant 0 : index
    %c0_7 = arith.constant 0 : index
    %9 = vector.load %arg4[%c0_6, %c0_7] : memref<128x32xbf16, #tpu.memory_space<vmem>>, vector<128x32xbf16>
    tpu.vector_store %arg4[%c0_6, %c0_7], %8 {strides = array<i32>} : memref<128x32xbf16, #tpu.memory_space<vmem>>, vector<128x32xbf16>,
    return
  }
  func.func @transform_0(%arg0: i32) -> (i32, i32) {
    %c0_i32 = arith.constant 0 : i32
    %c0_i32_0 = arith.constant 0 : i32
    return %arg0, %c0_i32 : i32, i32
  }
  func.func @transform_1(%arg0: i32) -> (i32, i32) {
    %c0_i32 = arith.constant 0 : i32
    %c0_i32_0 = arith.constant 0 : i32
    %c0_i32_1 = arith.constant 0 : i32
    return %c0_i32, %c0_i32_0 : i32, i32
  }
  func.func @transform_2(%arg0: i32) -> (i32, i32) {
    %c0_i32 = arith.constant 0 : i32
    %c0_i32_0 = arith.constant 0 : i32
    %c0_i32_1 = arith.constant 0 : i32
    return %c0_i32, %c0_i32_0 : i32, i32
  }
  func.func @transform_3(%arg0: i32) -> (i32, i32) {
    %c0_i32 = arith.constant 0 : i32
    %c0_i32_0 = arith.constant 0 : i32
    return %arg0, %c0_i32 : i32, i32
  }
}

module attributes {stable_mosaic.version = 11 : i64} {
  func.func @_fused_matmul_kernel(%arg0: i32, %arg1: memref<32x288xbf16, #tpu.memory_space<vmem>>, %arg2: memref<288x32xbf16, #tpu.memory_space<vmem>>, %arg3: memref<1x32xf32, #tpu.memory_space<vmem>>, %arg4: memref<32x32xbf16, #tpu.memory_space<vmem>>) attributes {dimension_semantics = [#tpu.dimension_semantics<parallel>], iteration_bounds = array<i64: 1>, scalar_prefetch = 0 : i64, scratch_operands = 0 : i64, tpu.core_type = #tpu.core_type<tc>, window_params = [{transform_indices = @transform_0, window_bounds = array<i64: 32, 288>}, {pipeline_mode = #tpu.pipeline_mode<synchronous>, transform_indices = @transform_1, window_bounds = array<i64: 288, 32>}, {pipeline_mode = #tpu.pipeline_mode<synchronous>, transform_indices = @transform_2, window_bounds = array<i64: 1, 32>}, {transform_indices = @transform_3, window_bounds = array<i64: 32, 32>}]} {
    %c0 = arith.constant 0 : index
    %c0_0 = arith.constant 0 : index
    %0 = vector.load %arg1[%c0, %c0_0] : memref<32x288xbf16, #tpu.memory_space<vmem>>, vector<32x288xbf16>
    %c0_1 = arith.constant 0 : index
    %c0_2 = arith.constant 0 : index
    %1 = vector.load %arg2[%c0_1, %c0_2] : memref<288x32xbf16, #tpu.memory_space<vmem>>, vector<288x32xbf16>
    %cst = arith.constant dense<0.000000e+00> : vector<32x32xf32>
    %2 = tpu.matmul %0, %1, %cst {dimension_numbers = #tpu.dot_dimension_numbers<[1], [0], [0], [1], [0, 0, 1, 1], [], []>} : vector<32x288xbf16>, vector<288x32xbf16>, vector<32x32xf32> -> vector<32x32xf32>
    %c0_3 = arith.constant 0 : index
    %c0_4 = arith.constant 0 : index
    %3 = vector.load %arg3[%c0_3, %c0_4] : memref<1x32xf32, #tpu.memory_space<vmem>>, vector<1x32xf32>
    %4 = vector.broadcast %3 : vector<1x32xf32> to vector<32x32xf32>
    %5 = arith.addf %2, %4 : vector<32x32xf32>
    %cst_5 = arith.constant 0.000000e+00 : f32
    %6 = vector.broadcast %cst_5 : f32 to vector<32x32xf32>
    %7 = arith.maximumf %5, %6 : vector<32x32xf32>
    %8 = arith.truncf %7 : vector<32x32xf32> to vector<32x32xbf16>
    %c0_6 = arith.constant 0 : index
    %c0_7 = arith.constant 0 : index
    %9 = vector.load %arg4[%c0_6, %c0_7] : memref<32x32xbf16, #tpu.memory_space<vmem>>, vector<32x32xbf16>
    tpu.vector_store %arg4[%c0_6, %c0_7], %8 {strides = array<i32>} : memref<32x32xbf16, #tpu.memory_space<vmem>>, vector<32x32xbf16>,
    return
  }
  func.func @transform_0(%arg0: i32) -> (i32, i32) {
    %c0_i32 = arith.constant 0 : i32
    %c0_i32_0 = arith.constant 0 : i32
    return %arg0, %c0_i32 : i32, i32
  }
  func.func @transform_1(%arg0: i32) -> (i32, i32) {
    %c0_i32 = arith.constant 0 : i32
    %c0_i32_0 = arith.constant 0 : i32
    %c0_i32_1 = arith.constant 0 : i32
    return %c0_i32, %c0_i32_0 : i32, i32
  }
  func.func @transform_2(%arg0: i32) -> (i32, i32) {
    %c0_i32 = arith.constant 0 : i32
    %c0_i32_0 = arith.constant 0 : i32
    %c0_i32_1 = arith.constant 0 : i32
    return %c0_i32, %c0_i32_0 : i32, i32
  }
  func.func @transform_3(%arg0: i32) -> (i32, i32) {
    %c0_i32 = arith.constant 0 : i32
    %c0_i32_0 = arith.constant 0 : i32
    return %arg0, %c0_i32 : i32, i32
  }
}

module attributes {stable_mosaic.version = 11 : i64} {
  func.func @_fused_matmul_kernel(%arg0: i32, %arg1: memref<8x288xbf16, #tpu.memory_space<vmem>>, %arg2: memref<288x64xbf16, #tpu.memory_space<vmem>>, %arg3: memref<1x64xf32, #tpu.memory_space<vmem>>, %arg4: memref<8x64xbf16, #tpu.memory_space<vmem>>) attributes {dimension_semantics = [#tpu.dimension_semantics<parallel>], iteration_bounds = array<i64: 1>, scalar_prefetch = 0 : i64, scratch_operands = 0 : i64, tpu.core_type = #tpu.core_type<tc>, window_params = [{transform_indices = @transform_0, window_bounds = array<i64: 8, 288>}, {pipeline_mode = #tpu.pipeline_mode<synchronous>, transform_indices = @transform_1, window_bounds = array<i64: 288, 64>}, {pipeline_mode = #tpu.pipeline_mode<synchronous>, transform_indices = @transform_2, window_bounds = array<i64: 1, 64>}, {transform_indices = @transform_3, window_bounds = array<i64: 8, 64>}]} {
    %c0 = arith.constant 0 : index
    %c0_0 = arith.constant 0 : index
    %0 = vector.load %arg1[%c0, %c0_0] : memref<8x288xbf16, #tpu.memory_space<vmem>>, vector<8x288xbf16>
    %c0_1 = arith.constant 0 : index
    %c0_2 = arith.constant 0 : index
    %1 = vector.load %arg2[%c0_1, %c0_2] : memref<288x64xbf16, #tpu.memory_space<vmem>>, vector<288x64xbf16>
    %cst = arith.constant dense<0.000000e+00> : vector<8x64xf32>
    %2 = tpu.matmul %0, %1, %cst {dimension_numbers = #tpu.dot_dimension_numbers<[1], [0], [0], [1], [0, 0, 1, 1], [], []>} : vector<8x288xbf16>, vector<288x64xbf16>, vector<8x64xf32> -> vector<8x64xf32>
    %c0_3 = arith.constant 0 : index
    %c0_4 = arith.constant 0 : index
    %3 = vector.load %arg3[%c0_3, %c0_4] : memref<1x64xf32, #tpu.memory_space<vmem>>, vector<1x64xf32>
    %4 = vector.broadcast %3 : vector<1x64xf32> to vector<8x64xf32>
    %5 = arith.addf %2, %4 : vector<8x64xf32>
    %cst_5 = arith.constant 0.000000e+00 : f32
    %6 = vector.broadcast %cst_5 : f32 to vector<8x64xf32>
    %7 = arith.maximumf %5, %6 : vector<8x64xf32>
    %8 = arith.truncf %7 : vector<8x64xf32> to vector<8x64xbf16>
    %c0_6 = arith.constant 0 : index
    %c0_7 = arith.constant 0 : index
    %9 = vector.load %arg4[%c0_6, %c0_7] : memref<8x64xbf16, #tpu.memory_space<vmem>>, vector<8x64xbf16>
    tpu.vector_store %arg4[%c0_6, %c0_7], %8 {strides = array<i32>} : memref<8x64xbf16, #tpu.memory_space<vmem>>, vector<8x64xbf16>,
    return
  }
  func.func @transform_0(%arg0: i32) -> (i32, i32) {
    %c0_i32 = arith.constant 0 : i32
    %c0_i32_0 = arith.constant 0 : i32
    return %arg0, %c0_i32 : i32, i32
  }
  func.func @transform_1(%arg0: i32) -> (i32, i32) {
    %c0_i32 = arith.constant 0 : i32
    %c0_i32_0 = arith.constant 0 : i32
    %c0_i32_1 = arith.constant 0 : i32
    return %c0_i32, %c0_i32_0 : i32, i32
  }
  func.func @transform_2(%arg0: i32) -> (i32, i32) {
    %c0_i32 = arith.constant 0 : i32
    %c0_i32_0 = arith.constant 0 : i32
    %c0_i32_1 = arith.constant 0 : i32
    return %c0_i32, %c0_i32_0 : i32, i32
  }
  func.func @transform_3(%arg0: i32) -> (i32, i32) {
    %c0_i32 = arith.constant 0 : i32
    %c0_i32_0 = arith.constant 0 : i32
    return %arg0, %c0_i32 : i32, i32
  }
}

module attributes {stable_mosaic.version = 11 : i64} {
  func.func @_fused_matmul_kernel(%arg0: i32, %arg1: memref<8x576xbf16, #tpu.memory_space<vmem>>, %arg2: memref<576x64xbf16, #tpu.memory_space<vmem>>, %arg3: memref<1x64xf32, #tpu.memory_space<vmem>>, %arg4: memref<8x64xbf16, #tpu.memory_space<vmem>>) attributes {dimension_semantics = [#tpu.dimension_semantics<parallel>], iteration_bounds = array<i64: 1>, scalar_prefetch = 0 : i64, scratch_operands = 0 : i64, tpu.core_type = #tpu.core_type<tc>, window_params = [{transform_indices = @transform_0, window_bounds = array<i64: 8, 576>}, {pipeline_mode = #tpu.pipeline_mode<synchronous>, transform_indices = @transform_1, window_bounds = array<i64: 576, 64>}, {pipeline_mode = #tpu.pipeline_mode<synchronous>, transform_indices = @transform_2, window_bounds = array<i64: 1, 64>}, {transform_indices = @transform_3, window_bounds = array<i64: 8, 64>}]} {
    %c0 = arith.constant 0 : index
    %c0_0 = arith.constant 0 : index
    %0 = vector.load %arg1[%c0, %c0_0] : memref<8x576xbf16, #tpu.memory_space<vmem>>, vector<8x576xbf16>
    %c0_1 = arith.constant 0 : index
    %c0_2 = arith.constant 0 : index
    %1 = vector.load %arg2[%c0_1, %c0_2] : memref<576x64xbf16, #tpu.memory_space<vmem>>, vector<576x64xbf16>
    %cst = arith.constant dense<0.000000e+00> : vector<8x64xf32>
    %2 = tpu.matmul %0, %1, %cst {dimension_numbers = #tpu.dot_dimension_numbers<[1], [0], [0], [1], [0, 0, 1, 1], [], []>} : vector<8x576xbf16>, vector<576x64xbf16>, vector<8x64xf32> -> vector<8x64xf32>
    %c0_3 = arith.constant 0 : index
    %c0_4 = arith.constant 0 : index
    %3 = vector.load %arg3[%c0_3, %c0_4] : memref<1x64xf32, #tpu.memory_space<vmem>>, vector<1x64xf32>
    %4 = vector.broadcast %3 : vector<1x64xf32> to vector<8x64xf32>
    %5 = arith.addf %2, %4 : vector<8x64xf32>
    %cst_5 = arith.constant 0.000000e+00 : f32
    %6 = vector.broadcast %cst_5 : f32 to vector<8x64xf32>
    %7 = arith.maximumf %5, %6 : vector<8x64xf32>
    %8 = arith.truncf %7 : vector<8x64xf32> to vector<8x64xbf16>
    %c0_6 = arith.constant 0 : index
    %c0_7 = arith.constant 0 : index
    %9 = vector.load %arg4[%c0_6, %c0_7] : memref<8x64xbf16, #tpu.memory_space<vmem>>, vector<8x64xbf16>
    tpu.vector_store %arg4[%c0_6, %c0_7], %8 {strides = array<i32>} : memref<8x64xbf16, #tpu.memory_space<vmem>>, vector<8x64xbf16>,
    return
  }
  func.func @transform_0(%arg0: i32) -> (i32, i32) {
    %c0_i32 = arith.constant 0 : i32
    %c0_i32_0 = arith.constant 0 : i32
    return %arg0, %c0_i32 : i32, i32
  }
  func.func @transform_1(%arg0: i32) -> (i32, i32) {
    %c0_i32 = arith.constant 0 : i32
    %c0_i32_0 = arith.constant 0 : i32
    %c0_i32_1 = arith.constant 0 : i32
    return %c0_i32, %c0_i32_0 : i32, i32
  }
  func.func @transform_2(%arg0: i32) -> (i32, i32) {
    %c0_i32 = arith.constant 0 : i32
    %c0_i32_0 = arith.constant 0 : i32
    %c0_i32_1 = arith.constant 0 : i32
    return %c0_i32, %c0_i32_0 : i32, i32
  }
  func.func @transform_3(%arg0: i32) -> (i32, i32) {
    %c0_i32 = arith.constant 0 : i32
    %c0_i32_0 = arith.constant 0 : i32
    return %arg0, %c0_i32 : i32, i32
  }
}

module attributes {stable_mosaic.version = 11 : i64} {
  func.func @_fused_matmul_kernel(%arg0: i32, %arg1: memref<8x64xbf16, #tpu.memory_space<vmem>>, %arg2: memref<64x512xbf16, #tpu.memory_space<vmem>>, %arg3: memref<1x512xf32, #tpu.memory_space<vmem>>, %arg4: memref<8x512xbf16, #tpu.memory_space<vmem>>) attributes {dimension_semantics = [#tpu.dimension_semantics<parallel>], iteration_bounds = array<i64: 1>, scalar_prefetch = 0 : i64, scratch_operands = 0 : i64, tpu.core_type = #tpu.core_type<tc>, window_params = [{transform_indices = @transform_0, window_bounds = array<i64: 8, 64>}, {pipeline_mode = #tpu.pipeline_mode<synchronous>, transform_indices = @transform_1, window_bounds = array<i64: 64, 512>}, {pipeline_mode = #tpu.pipeline_mode<synchronous>, transform_indices = @transform_2, window_bounds = array<i64: 1, 512>}, {transform_indices = @transform_3, window_bounds = array<i64: 8, 512>}]} {
    %c0 = arith.constant 0 : index
    %c0_0 = arith.constant 0 : index
    %0 = vector.load %arg1[%c0, %c0_0] : memref<8x64xbf16, #tpu.memory_space<vmem>>, vector<8x64xbf16>
    %c0_1 = arith.constant 0 : index
    %c0_2 = arith.constant 0 : index
    %1 = vector.load %arg2[%c0_1, %c0_2] : memref<64x512xbf16, #tpu.memory_space<vmem>>, vector<64x512xbf16>
    %cst = arith.constant dense<0.000000e+00> : vector<8x512xf32>
    %2 = tpu.matmul %0, %1, %cst {dimension_numbers = #tpu.dot_dimension_numbers<[1], [0], [0], [1], [0, 0, 1, 1], [], []>} : vector<8x64xbf16>, vector<64x512xbf16>, vector<8x512xf32> -> vector<8x512xf32>
    %c0_3 = arith.constant 0 : index
    %c0_4 = arith.constant 0 : index
    %3 = vector.load %arg3[%c0_3, %c0_4] : memref<1x512xf32, #tpu.memory_space<vmem>>, vector<1x512xf32>
    %4 = vector.broadcast %3 : vector<1x512xf32> to vector<8x512xf32>
    %5 = arith.addf %2, %4 : vector<8x512xf32>
    %cst_5 = arith.constant 0.000000e+00 : f32
    %6 = vector.broadcast %cst_5 : f32 to vector<8x512xf32>
    %7 = arith.maximumf %5, %6 : vector<8x512xf32>
    %8 = arith.truncf %7 : vector<8x512xf32> to vector<8x512xbf16>
    %c0_6 = arith.constant 0 : index
    %c0_7 = arith.constant 0 : index
    %9 = vector.load %arg4[%c0_6, %c0_7] : memref<8x512xbf16, #tpu.memory_space<vmem>>, vector<8x512xbf16>
    tpu.vector_store %arg4[%c0_6, %c0_7], %8 {strides = array<i32>} : memref<8x512xbf16, #tpu.memory_space<vmem>>, vector<8x512xbf16>,
    return
  }
  func.func @transform_0(%arg0: i32) -> (i32, i32) {
    %c0_i32 = arith.constant 0 : i32
    %c0_i32_0 = arith.constant 0 : i32
    return %arg0, %c0_i32 : i32, i32
  }
  func.func @transform_1(%arg0: i32) -> (i32, i32) {
    %c0_i32 = arith.constant 0 : i32
    %c0_i32_0 = arith.constant 0 : i32
    %c0_i32_1 = arith.constant 0 : i32
    return %c0_i32, %c0_i32_0 : i32, i32
  }
  func.func @transform_2(%arg0: i32) -> (i32, i32) {
    %c0_i32 = arith.constant 0 : i32
    %c0_i32_0 = arith.constant 0 : i32
    %c0_i32_1 = arith.constant 0 : i32
    return %c0_i32, %c0_i32_0 : i32, i32
  }
  func.func @transform_3(%arg0: i32) -> (i32, i32) {
    %c0_i32 = arith.constant 0 : i32
    %c0_i32_0 = arith.constant 0 : i32
    return %arg0, %c0_i32 : i32, i32
  }
}

module attributes {stable_mosaic.version = 11 : i64} {
  func.func @_fused_matmul_kernel(%arg0: i32, %arg1: memref<32x32xbf16, #tpu.memory_space<vmem>>, %arg2: memref<32x128xbf16, #tpu.memory_space<vmem>>, %arg3: memref<1x128xf32, #tpu.memory_space<vmem>>, %arg4: memref<32x128xbf16, #tpu.memory_space<vmem>>) attributes {dimension_semantics = [#tpu.dimension_semantics<parallel>], iteration_bounds = array<i64: 1>, scalar_prefetch = 0 : i64, scratch_operands = 0 : i64, tpu.core_type = #tpu.core_type<tc>, window_params = [{transform_indices = @transform_0, window_bounds = array<i64: 32, 32>}, {pipeline_mode = #tpu.pipeline_mode<synchronous>, transform_indices = @transform_1, window_bounds = array<i64: 32, 128>}, {pipeline_mode = #tpu.pipeline_mode<synchronous>, transform_indices = @transform_2, window_bounds = array<i64: 1, 128>}, {transform_indices = @transform_3, window_bounds = array<i64: 32, 128>}]} {
    %c0 = arith.constant 0 : index
    %c0_0 = arith.constant 0 : index
    %0 = vector.load %arg1[%c0, %c0_0] : memref<32x32xbf16, #tpu.memory_space<vmem>>, vector<32x32xbf16>
    %c0_1 = arith.constant 0 : index
    %c0_2 = arith.constant 0 : index
    %1 = vector.load %arg2[%c0_1, %c0_2] : memref<32x128xbf16, #tpu.memory_space<vmem>>, vector<32x128xbf16>
    %cst = arith.constant dense<0.000000e+00> : vector<32x128xf32>
    %2 = tpu.matmul %0, %1, %cst {dimension_numbers = #tpu.dot_dimension_numbers<[1], [0], [0], [1], [0, 0, 1, 1], [], []>} : vector<32x32xbf16>, vector<32x128xbf16>, vector<32x128xf32> -> vector<32x128xf32>
    %c0_3 = arith.constant 0 : index
    %c0_4 = arith.constant 0 : index
    %3 = vector.load %arg3[%c0_3, %c0_4] : memref<1x128xf32, #tpu.memory_space<vmem>>, vector<1x128xf32>
    %4 = vector.broadcast %3 : vector<1x128xf32> to vector<32x128xf32>
    %5 = arith.addf %2, %4 : vector<32x128xf32>
    %cst_5 = arith.constant 0.000000e+00 : f32
    %6 = vector.broadcast %cst_5 : f32 to vector<32x128xf32>
    %7 = arith.maximumf %5, %6 : vector<32x128xf32>
    %8 = arith.truncf %7 : vector<32x128xf32> to vector<32x128xbf16>
    %c0_6 = arith.constant 0 : index
    %c0_7 = arith.constant 0 : index
    %9 = vector.load %arg4[%c0_6, %c0_7] : memref<32x128xbf16, #tpu.memory_space<vmem>>, vector<32x128xbf16>
    tpu.vector_store %arg4[%c0_6, %c0_7], %8 {strides = array<i32>} : memref<32x128xbf16, #tpu.memory_space<vmem>>, vector<32x128xbf16>,
    return
  }
  func.func @transform_0(%arg0: i32) -> (i32, i32) {
    %c0_i32 = arith.constant 0 : i32
    %c0_i32_0 = arith.constant 0 : i32
    return %arg0, %c0_i32 : i32, i32
  }
  func.func @transform_1(%arg0: i32) -> (i32, i32) {
    %c0_i32 = arith.constant 0 : i32
    %c0_i32_0 = arith.constant 0 : i32
    %c0_i32_1 = arith.constant 0 : i32
    return %c0_i32, %c0_i32_0 : i32, i32
  }
  func.func @transform_2(%arg0: i32) -> (i32, i32) {
    %c0_i32 = arith.constant 0 : i32
    %c0_i32_0 = arith.constant 0 : i32
    %c0_i32_1 = arith.constant 0 : i32
    return %c0_i32, %c0_i32_0 : i32, i32
  }
  func.func @transform_3(%arg0: i32) -> (i32, i32) {
    %c0_i32 = arith.constant 0 : i32
    %c0_i32_0 = arith.constant 0 : i32
    return %arg0, %c0_i32 : i32, i32
  }
}

module attributes {stable_mosaic.version = 11 : i64} {
  func.func @_fused_matmul_kernel(%arg0: i32, %arg1: memref<128x32xbf16, #tpu.memory_space<vmem>>, %arg2: memref<32x32xbf16, #tpu.memory_space<vmem>>, %arg3: memref<1x32xf32, #tpu.memory_space<vmem>>, %arg4: memref<128x32xbf16, #tpu.memory_space<vmem>>) attributes {dimension_semantics = [#tpu.dimension_semantics<parallel>], iteration_bounds = array<i64: 1>, scalar_prefetch = 0 : i64, scratch_operands = 0 : i64, tpu.core_type = #tpu.core_type<tc>, window_params = [{transform_indices = @transform_0, window_bounds = array<i64: 128, 32>}, {pipeline_mode = #tpu.pipeline_mode<synchronous>, transform_indices = @transform_1, window_bounds = array<i64: 32, 32>}, {pipeline_mode = #tpu.pipeline_mode<synchronous>, transform_indices = @transform_2, window_bounds = array<i64: 1, 32>}, {transform_indices = @transform_3, window_bounds = array<i64: 128, 32>}]} {
    %c0 = arith.constant 0 : index
    %c0_0 = arith.constant 0 : index
    %0 = vector.load %arg1[%c0, %c0_0] : memref<128x32xbf16, #tpu.memory_space<vmem>>, vector<128x32xbf16>
    %c0_1 = arith.constant 0 : index
    %c0_2 = arith.constant 0 : index
    %1 = vector.load %arg2[%c0_1, %c0_2] : memref<32x32xbf16, #tpu.memory_space<vmem>>, vector<32x32xbf16>
    %cst = arith.constant dense<0.000000e+00> : vector<128x32xf32>
    %2 = tpu.matmul %0, %1, %cst {dimension_numbers = #tpu.dot_dimension_numbers<[1], [0], [0], [1], [0, 0, 1, 1], [], []>} : vector<128x32xbf16>, vector<32x32xbf16>, vector<128x32xf32> -> vector<128x32xf32>
    %c0_3 = arith.constant 0 : index
    %c0_4 = arith.constant 0 : index
    %3 = vector.load %arg3[%c0_3, %c0_4] : memref<1x32xf32, #tpu.memory_space<vmem>>, vector<1x32xf32>
    %4 = vector.broadcast %3 : vector<1x32xf32> to vector<128x32xf32>
    %5 = arith.addf %2, %4 : vector<128x32xf32>
    %cst_5 = arith.constant 0.000000e+00 : f32
    %6 = vector.broadcast %cst_5 : f32 to vector<128x32xf32>
    %7 = arith.maximumf %5, %6 : vector<128x32xf32>
    %8 = arith.truncf %7 : vector<128x32xf32> to vector<128x32xbf16>
    %c0_6 = arith.constant 0 : index
    %c0_7 = arith.constant 0 : index
    %9 = vector.load %arg4[%c0_6, %c0_7] : memref<128x32xbf16, #tpu.memory_space<vmem>>, vector<128x32xbf16>
    tpu.vector_store %arg4[%c0_6, %c0_7], %8 {strides = array<i32>} : memref<128x32xbf16, #tpu.memory_space<vmem>>, vector<128x32xbf16>,
    return
  }
  func.func @transform_0(%arg0: i32) -> (i32, i32) {
    %c0_i32 = arith.constant 0 : i32
    %c0_i32_0 = arith.constant 0 : i32
    return %arg0, %c0_i32 : i32, i32
  }
  func.func @transform_1(%arg0: i32) -> (i32, i32) {
    %c0_i32 = arith.constant 0 : i32
    %c0_i32_0 = arith.constant 0 : i32
    %c0_i32_1 = arith.constant 0 : i32
    return %c0_i32, %c0_i32_0 : i32, i32
  }
  func.func @transform_2(%arg0: i32) -> (i32, i32) {
    %c0_i32 = arith.constant 0 : i32
    %c0_i32_0 = arith.constant 0 : i32
    %c0_i32_1 = arith.constant 0 : i32
    return %c0_i32, %c0_i32_0 : i32, i32
  }
  func.func @transform_3(%arg0: i32) -> (i32, i32) {
    %c0_i32 = arith.constant 0 : i32
    %c0_i32_0 = arith.constant 0 : i32
    return %arg0, %c0_i32 : i32, i32
  }
}

module attributes {stable_mosaic.version = 11 : i64} {
  func.func @_fused_matmul_kernel(%arg0: i32, %arg1: memref<128x96xbf16, #tpu.memory_space<vmem>>, %arg2: memref<96x22xbf16, #tpu.memory_space<vmem>>, %arg3: memref<1x22xf32, #tpu.memory_space<vmem>>, %arg4: memref<128x22xf32, #tpu.memory_space<vmem>>) attributes {dimension_semantics = [#tpu.dimension_semantics<parallel>], iteration_bounds = array<i64: 1>, scalar_prefetch = 0 : i64, scratch_operands = 0 : i64, tpu.core_type = #tpu.core_type<tc>, window_params = [{transform_indices = @transform_0, window_bounds = array<i64: 128, 96>}, {pipeline_mode = #tpu.pipeline_mode<synchronous>, transform_indices = @transform_1, window_bounds = array<i64: 96, 22>}, {pipeline_mode = #tpu.pipeline_mode<synchronous>, transform_indices = @transform_2, window_bounds = array<i64: 1, 22>}, {transform_indices = @transform_3, window_bounds = array<i64: 128, 22>}]} {
    %c0 = arith.constant 0 : index
    %c0_0 = arith.constant 0 : index
    %0 = vector.load %arg1[%c0, %c0_0] : memref<128x96xbf16, #tpu.memory_space<vmem>>, vector<128x96xbf16>
    %c0_1 = arith.constant 0 : index
    %c0_2 = arith.constant 0 : index
    %1 = vector.load %arg2[%c0_1, %c0_2] : memref<96x22xbf16, #tpu.memory_space<vmem>>, vector<96x22xbf16>
    %cst = arith.constant dense<0.000000e+00> : vector<128x22xf32>
    %2 = tpu.matmul %0, %1, %cst {dimension_numbers = #tpu.dot_dimension_numbers<[1], [0], [0], [1], [0, 0, 1, 1], [], []>} : vector<128x96xbf16>, vector<96x22xbf16>, vector<128x22xf32> -> vector<128x22xf32>
    %c0_3 = arith.constant 0 : index
    %c0_4 = arith.constant 0 : index
    %3 = vector.load %arg3[%c0_3, %c0_4] : memref<1x22xf32, #tpu.memory_space<vmem>>, vector<1x22xf32>
    %4 = vector.broadcast %3 : vector<1x22xf32> to vector<128x22xf32>
    %5 = arith.addf %2, %4 : vector<128x22xf32>
    %c0_5 = arith.constant 0 : index
    %c0_6 = arith.constant 0 : index
    %6 = vector.load %arg4[%c0_5, %c0_6] : memref<128x22xf32, #tpu.memory_space<vmem>>, vector<128x22xf32>
    tpu.vector_store %arg4[%c0_5, %c0_6], %5 {strides = array<i32>} : memref<128x22xf32, #tpu.memory_space<vmem>>, vector<128x22xf32>,
    return
  }
  func.func @transform_0(%arg0: i32) -> (i32, i32) {
    %c0_i32 = arith.constant 0 : i32
    %c0_i32_0 = arith.constant 0 : i32
    return %arg0, %c0_i32 : i32, i32
  }
  func.func @transform_1(%arg0: i32) -> (i32, i32) {
    %c0_i32 = arith.constant 0 : i32
    %c0_i32_0 = arith.constant 0 : i32
    %c0_i32_1 = arith.constant 0 : i32
    return %c0_i32, %c0_i32_0 : i32, i32
  }
  func.func @transform_2(%arg0: i32) -> (i32, i32) {
    %c0_i32 = arith.constant 0 : i32
    %c0_i32_0 = arith.constant 0 : i32
    %c0_i32_1 = arith.constant 0 : i32
    return %c0_i32, %c0_i32_0 : i32, i32
  }
  func.func @transform_3(%arg0: i32) -> (i32, i32) {
    %c0_i32 = arith.constant 0 : i32
    %c0_i32_0 = arith.constant 0 : i32
    return %arg0, %c0_i32 : i32, i32
  }
}

</mosaic_0001>

<llo_original>
// kernel: rpn_forward.10
$region0: #{rpn_forward.10}
  #allocation0 [shape = 'u32[]', space=smem, size = 0x4, offset = 0x4, fixed_abs, tag = 'smem constant byte address 0x4 - core index']
  #allocation1 [shape = 'u32[144,128]{1,0:T(1,128)}', space=vmem, size = 0x12000, scoped, tag = 'internal scratch']
  %s0 = inlined_call_operand.vmem [shape: bf16[128,288], index: 0, kind: input, shape index: {}]
  %s1 = inlined_call_operand.vmem [shape: bf16[288,32], index: 1, kind: input, shape index: {}]
  %s2 = inlined_call_operand.vmem [shape: f32[1,32], index: 2, kind: input, shape index: {}]
  %s3 = inlined_call_operand.vmem [shape: bf16[128,32], index: 3, kind: output, shape index: {}]
  %s4 = sld [smem:[#allocation0]]
  $region22: #{rpn_forward.10} parent=0
    _
  %s6 = ssub.s32 1, %s4
  %s7 = scalar_select 0, %s6, %s4
  // Predicated region
  $region2: #{rpn_forward.10} parent=0 // pred_check
    _
  $region3: #{rpn_forward.10} parent=0 // pred_check_branch
    %9 = sbr.rel (0) target = $region5
  $region4: #{rpn_forward.10} parent=0 // pred_region
    _
  $region5: #{rpn_forward.10} parent=0 // pred_fallthru
    _
  // Predicated region
  $region6: #{rpn_forward.10} parent=0 // pred_check
    _
  $region7: #{rpn_forward.10} parent=0 // pred_check_branch
    %11 = sbr.rel (0) target = $region9
  $region8: #{rpn_forward.10} parent=0 // pred_region
    _
  $region9: #{rpn_forward.10} parent=0 // pred_fallthru
    _
  // Predicated region
  $region10: #{rpn_forward.10} parent=0 // pred_check
    _
  $region11: #{rpn_forward.10} parent=0 // pred_check_branch
    %13 = sbr.rel (0) target = $region13
  $region12: #{rpn_forward.10} parent=0 // pred_region
    _
  $region13: #{rpn_forward.10} parent=0 // pred_fallthru
    _
  %v15 = vld [vmem:[%s0] sm:$0xff]
  %v16 = vld [vmem:[%s0 + $0x8] sm:$0xf]
  %v17 = vld [vmem:[%s0 + $0xc] sm:$0xff]
  %v18 = vld [vmem:[%s0 + $0x14] sm:$0xf]
  %v19 = vld [vmem:[%s0 + $0x18] sm:$0xff]
  %v20 = vld [vmem:[%s0 + $0x20] sm:$0xf]
  %v21 = vld [vmem:[%s0 + $0x24] sm:$0xff]
  %v22 = vld [vmem:[%s0 + $0x2c] sm:$0xf]
  %v23 = vld [vmem:[%s0 + $0x30] sm:$0xff]
  %v24 = vld [vmem:[%s0 + $0x38] sm:$0xf]
  %v25 = vld [vmem:[%s0 + $0x3c] sm:$0xff]
  %v26 = vld [vmem:[%s0 + $0x44] sm:$0xf]
  %v27 = vld [vmem:[%s0 + $0x48] sm:$0xff]
  %v28 = vld [vmem:[%s0 + $0x50] sm:$0xf]
  %v29 = vld [vmem:[%s0 + $0x54] sm:$0xff]
  %v30 = vld [vmem:[%s0 + $0x5c] sm:$0xf]
  %v31 = vld [vmem:[%s0 + $0x60] sm:$0xff]
  %v32 = vld [vmem:[%s0 + $0x68] sm:$0xf]
  %v33 = vld [vmem:[%s0 + $0x6c] sm:$0xff]
  %v34 = vld [vmem:[%s0 + $0x74] sm:$0xf]
  %v35 = vld [vmem:[%s0 + $0x78] sm:$0xff]
  %v36 = vld [vmem:[%s0 + $0x80] sm:$0xf]
  %v37 = vld [vmem:[%s0 + $0x84] sm:$0xff]
  %v38 = vld [vmem:[%s0 + $0x8c] sm:$0xf]
  %v39 = vld [vmem:[%s0 + $0x90] sm:$0xff]
  %v40 = vld [vmem:[%s0 + $0x98] sm:$0xf]
  %v41 = vld [vmem:[%s0 + $0x9c] sm:$0xff]
  %v42 = vld [vmem:[%s0 + $0xa4] sm:$0xf]
  %v43 = vld [vmem:[%s0 + $0xa8] sm:$0xff]
  %v44 = vld [vmem:[%s0 + $0xb0] sm:$0xf]
  %v45 = vld [vmem:[%s0 + $0xb4] sm:$0xff]
  %v46 = vld [vmem:[%s0 + $0xbc] sm:$0xf]
  %v47 = vld [vmem:[%s1] sm:$0xf]
  %v48 = vld [vmem:[%s1 + $0x4] sm:$0xf]
  %v49 = vld [vmem:[%s1 + $0x8] sm:$0xf]
  %v50 = vld [vmem:[%s1 + $0xc] sm:$0xf]
  %v51 = vld [vmem:[%s1 + $0x10] sm:$0xf]
  %v52 = vld [vmem:[%s1 + $0x14] sm:$0xf]
  %v53 = vld [vmem:[%s1 + $0x18] sm:$0xf]
  %v54 = vld [vmem:[%s1 + $0x1c] sm:$0xf]
  %v55 = vld [vmem:[%s1 + $0x20] sm:$0xf]
  %v56 = vld [vmem:[%s1 + $0x24] sm:$0xf]
  %v57 = vld [vmem:[%s1 + $0x28] sm:$0xf]
  %v58 = vld [vmem:[%s1 + $0x2c] sm:$0xf]
  %v59 = vld [vmem:[%s1 + $0x30] sm:$0xf]
  %v60 = vld [vmem:[%s1 + $0x34] sm:$0xf]
  %v61 = vld [vmem:[%s1 + $0x38] sm:$0xf]
  %v62 = vld [vmem:[%s1 + $0x3c] sm:$0xf]
  %v63 = vld [vmem:[%s1 + $0x40] sm:$0xf]
  %v64 = vld [vmem:[%s1 + $0x44] sm:$0xf]
  %v65 = vld [vmem:[%s1 + $0x48] sm:$0xf]
  %v66 = vld [vmem:[%s1 + $0x4c] sm:$0xf]
  %v67 = vld [vmem:[%s1 + $0x50] sm:$0xf]
  %v68 = vld [vmem:[%s1 + $0x54] sm:$0xf]
  %v69 = vld [vmem:[%s1 + $0x58] sm:$0xf]
  %v70 = vld [vmem:[%s1 + $0x5c] sm:$0xf]
  %v71 = vld [vmem:[%s1 + $0x60] sm:$0xf]
  %v72 = vld [vmem:[%s1 + $0x64] sm:$0xf]
  %v73 = vld [vmem:[%s1 + $0x68] sm:$0xf]
  %v74 = vld [vmem:[%s1 + $0x6c] sm:$0xf]
  %v75 = vld [vmem:[%s1 + $0x70] sm:$0xf]
  %v76 = vld [vmem:[%s1 + $0x74] sm:$0xf]
  %v77 = vld [vmem:[%s1 + $0x78] sm:$0xf]
  %v78 = vld [vmem:[%s1 + $0x7c] sm:$0xf]
  %v79 = vld [vmem:[%s1 + $0x80] sm:$0xf]
  %v80 = vld [vmem:[%s1 + $0x84] sm:$0xf]
  %v81 = vld [vmem:[%s1 + $0x88] sm:$0xf]
  %v82 = vld [vmem:[%s1 + $0x8c] sm:$0xf]
  %v83 = vld [vmem:[%s2] sm:$0x1]
  %v85 = vlaneseq
  %v86 = vshrl.u32 %v85, 7
  %v87 = vsub.s32 0, %v86
  %v88 = vrot.slane %v83, %v87
  %v122 = vunpack.c.l.b16 %v15
  %v123 = vunpack.c.h.b16 %v15
  %v124 = vunpack.c.l.b16 %v16
  %v125 = vunpack.c.l.b16 %v17
  %v126 = vunpack.c.h.b16 %v17
  %v127 = vunpack.c.l.b16 %v18
  %v128 = vunpack.c.l.b16 %v19
  %v129 = vunpack.c.h.b16 %v19
  %v130 = vunpack.c.l.b16 %v20
  %v131 = vunpack.c.l.b16 %v21
  %v132 = vunpack.c.h.b16 %v21
  %v133 = vunpack.c.l.b16 %v22
  %v134 = vunpack.c.l.b16 %v23
  %v135 = vunpack.c.h.b16 %v23
  %v136 = vunpack.c.l.b16 %v24
  %v137 = vunpack.c.l.b16 %v25
  %v138 = vunpack.c.h.b16 %v25
  %v139 = vunpack.c.l.b16 %v26
  %v140 = vunpack.c.l.b16 %v27
  %v141 = vunpack.c.h.b16 %v27
  %v142 = vunpack.c.l.b16 %v28
  %v143 = vunpack.c.l.b16 %v29
  %v144 = vunpack.c.h.b16 %v29
  %v145 = vunpack.c.l.b16 %v30
  %v146 = vunpack.c.l.b16 %v31
  %v147 = vunpack.c.h.b16 %v31
  %v148 = vunpack.c.l.b16 %v32
  %v149 = vunpack.c.l.b16 %v33
  %v150 = vunpack.c.h.b16 %v33
  %v151 = vunpack.c.l.b16 %v34
  %v152 = vunpack.c.l.b16 %v35
  %v153 = vunpack.c.h.b16 %v35
  %v154 = vunpack.c.l.b16 %v36
  %v155 = vunpack.c.l.b16 %v37
  %v156 = vunpack.c.h.b16 %v37
  %v157 = vunpack.c.l.b16 %v38
  %v158 = vunpack.c.l.b16 %v39
  %v159 = vunpack.c.h.b16 %v39
  %v160 = vunpack.c.l.b16 %v40
  %v161 = vunpack.c.l.b16 %v41
  %v162 = vunpack.c.h.b16 %v41
  %v163 = vunpack.c.l.b16 %v42
  %v164 = vunpack.c.l.b16 %v43
  %v165 = vunpack.c.h.b16 %v43
  %v166 = vunpack.c.l.b16 %v44
  %v167 = vunpack.c.l.b16 %v45
  %v168 = vunpack.c.h.b16 %v45
  %v169 = vunpack.c.l.b16 %v46
  %v170 = vpack.c.b16 %v125, %v122
  %v171 = vpack.c.b16 %v126, %v123
  %v172 = vpack.c.b16 %v127, %v124
  %v173 = vpack.c.b16 %v131, %v128
  %v174 = vpack.c.b16 %v132, %v129
  %v175 = vpack.c.b16 %v133, %v130
  %v176 = vpack.c.b16 %v137, %v134
  %v177 = vpack.c.b16 %v138, %v135
  %v178 = vpack.c.b16 %v139, %v136
  %v179 = vpack.c.b16 %v143, %v140
  %v180 = vpack.c.b16 %v144, %v141
  %v181 = vpack.c.b16 %v145, %v142
  %v182 = vpack.c.b16 %v149, %v146
  %v183 = vpack.c.b16 %v150, %v147
  %v184 = vpack.c.b16 %v151, %v148
  %v185 = vpack.c.b16 %v155, %v152
  %v186 = vpack.c.b16 %v156, %v153
  %v187 = vpack.c.b16 %v157, %v154
  %v188 = vpack.c.b16 %v161, %v158
  %v189 = vpack.c.b16 %v162, %v159
  %v190 = vpack.c.b16 %v163, %v160
  %v191 = vpack.c.b16 %v167, %v164
  %v192 = vpack.c.b16 %v168, %v165
  %v193 = vpack.c.b16 %v169, %v166
  %v246 = vunpack.c.l.b16 %v47
  %v247 = vunpack.c.l.b16 %v48
  %v248 = vunpack.c.l.b16 %v49
  %v249 = vunpack.c.l.b16 %v50
  %v250 = vunpack.c.l.b16 %v51
  %v251 = vunpack.c.l.b16 %v52
  %v252 = vunpack.c.l.b16 %v53
  %v253 = vunpack.c.l.b16 %v54
  %v254 = vunpack.c.l.b16 %v55
  %v255 = vunpack.c.l.b16 %v56
  %v256 = vunpack.c.l.b16 %v57
  %v257 = vunpack.c.l.b16 %v58
  %v258 = vunpack.c.l.b16 %v59
  %v259 = vunpack.c.l.b16 %v60
  %v260 = vunpack.c.l.b16 %v61
  %v261 = vunpack.c.l.b16 %v62
  %v262 = vunpack.c.l.b16 %v63
  %v263 = vunpack.c.l.b16 %v64
  %v264 = vunpack.c.l.b16 %v65
  %v265 = vunpack.c.l.b16 %v66
  %v266 = vunpack.c.l.b16 %v67
  %v267 = vunpack.c.l.b16 %v68
  %v268 = vunpack.c.l.b16 %v69
  %v269 = vunpack.c.l.b16 %v70
  %v270 = vunpack.c.l.b16 %v71
  %v271 = vunpack.c.l.b16 %v72
  %v272 = vunpack.c.l.b16 %v73
  %v273 = vunpack.c.l.b16 %v74
  %v274 = vunpack.c.l.b16 %v75
  %v275 = vunpack.c.l.b16 %v76
  %v276 = vunpack.c.l.b16 %v77
  %v277 = vunpack.c.l.b16 %v78
  %v278 = vunpack.c.l.b16 %v79
  %v279 = vunpack.c.l.b16 %v80
  %v280 = vunpack.c.l.b16 %v81
  %v281 = vunpack.c.l.b16 %v82
  %v282 = vpack.c.b16 %v247, %v246
  %v283 = vpack.c.b16 %v249, %v248
  %v284 = vpack.c.b16 %v251, %v250
  %v285 = vpack.c.b16 %v253, %v252
  %v286 = vpack.c.b16 %v255, %v254
  %v287 = vpack.c.b16 %v257, %v256
  %v288 = vpack.c.b16 %v259, %v258
  %v289 = vpack.c.b16 %v261, %v260
  %v290 = vpack.c.b16 %v263, %v262
  %v291 = vpack.c.b16 %v265, %v264
  %v292 = vpack.c.b16 %v267, %v266
  %v293 = vpack.c.b16 %v269, %v268
  %v294 = vpack.c.b16 %v271, %v270
  %v295 = vpack.c.b16 %v273, %v272
  %v296 = vpack.c.b16 %v275, %v274
  %v297 = vpack.c.b16 %v277, %v276
  %v298 = vpack.c.b16 %v279, %v278
  %v299 = vpack.c.b16 %v281, %v280
  %vm318 = vcmask 261120
  %v320 = vsel %vm318, %v172, 0
  %v323 = vsel %vm318, %v175, 0
  %v326 = vsel %vm318, %v178, 0
  %v329 = vsel %vm318, %v181, 0
  %v332 = vsel %vm318, %v184, 0
  %v335 = vsel %vm318, %v187, 0
  %v338 = vsel %vm318, %v190, 0
  %v341 = vsel %vm318, %v193, 0
  %343 = vmatprep.subr.bf16.mxu0 0
  %344 = vmatpush1.bf16.msra.mxu0 %v282
  %345 = vmatprep.subr.bf16.mxu0 0
  %346 = vmatpush1.bf16.msra.mxu0 %v283
  %347 = vmatprep.subr.bf16.mxu0 0
  %348 = vmatpush1.bf16.msra.mxu0 %v284
  %349 = vmatprep.subr.bf16.mxu0 0
  %350 = vmatpush1.bf16.msra.mxu0 %v285
  %351 = vmatprep.subr.bf16.mxu0 0
  %352 = vmatpush1.bf16.msra.mxu0 %v286
  %353 = vmatprep.subr.bf16.mxu0 0
  %354 = vmatpush1.bf16.msra.mxu0 %v287
  %355 = vmatprep.subr.bf16.mxu0 0
  %356 = vmatpush1.bf16.msra.mxu0 %v288
  %357 = vmatprep.subr.bf16.mxu0 0
  %358 = vmatpush1.bf16.msra.mxu0 %v289
  %359 = vmatprep.subr.bf16.mxu0 0
  %360 = vmatpush1.bf16.msra.mxu0 %v290
  %361 = vmatprep.subr.bf16.mxu0 0
  %362 = vmatpush1.bf16.msra.mxu0 %v291
  %363 = vmatprep.subr.bf16.mxu0 0
  %364 = vmatpush1.bf16.msra.mxu0 %v292
  %365 = vmatprep.subr.bf16.mxu0 0
  %366 = vmatpush1.bf16.msra.mxu0 %v293
  %367 = vmatprep.subr.bf16.mxu0 0
  %368 = vmatpush1.bf16.msra.mxu0 %v294
  %369 = vmatprep.subr.bf16.mxu0 0
  %370 = vmatpush1.bf16.msra.mxu0 %v295
  %371 = vmatprep.subr.bf16.mxu0 0
  %372 = vmatpush1.bf16.msra.mxu0 %v296
  %373 = vmatprep.subr.bf16.mxu0 0
  %374 = vmatpush1.bf16.msra.mxu0 %v297
  %375 = vmatprep.mubr.bf16.mxu0 %v171
  %376 = vmatmul.mubr.bf16.gmra.mrb[0].mxu0 %v170
  %v377 = vpop.f32.mrb[0].mxu0
  %v378 = vadd.f32 %v88, %v377
  %v379 = vpop.f32.mrb[0].mxu0
  %v380 = vpop.f32.mrb[0].mxu0
  %v381 = vadd.f32 %v88, %v380
  %v382 = vpop.f32.mrb[0].mxu0
  %383 = vmatprep.mubr.bf16.mxu0 %v174
  %384 = vmatmul.mubr.bf16.gmra.mrb[0].mxu0 %v173
  %v385 = vpop.f32.mrb[0].mxu0
  %v386 = vadd.f32 %v88, %v385
  %v387 = vpop.f32.mrb[0].mxu0
  %v388 = vpop.f32.mrb[0].mxu0
  %v389 = vadd.f32 %v88, %v388
  %v390 = vpop.f32.mrb[0].mxu0
  %391 = vmatprep.mubr.bf16.mxu0 %v177
  %392 = vmatmul.mubr.bf16.gmra.mrb[0].mxu0 %v176
  %v393 = vpop.f32.mrb[0].mxu0
  %v394 = vadd.f32 %v88, %v393
  %v395 = vpop.f32.mrb[0].mxu0
  %v396 = vpop.f32.mrb[0].mxu0
  %v397 = vadd.f32 %v88, %v396
  %v398 = vpop.f32.mrb[0].mxu0
  %399 = vmatprep.mubr.bf16.mxu0 %v180
  %400 = vmatmul.mubr.bf16.gmra.mrb[0].mxu0 %v179
  %v401 = vpop.f32.mrb[0].mxu0
  %v402 = vadd.f32 %v88, %v401
  %v403 = vpop.f32.mrb[0].mxu0
  %v404 = vpop.f32.mrb[0].mxu0
  %v405 = vadd.f32 %v88, %v404
  %v406 = vpop.f32.mrb[0].mxu0
  %407 = vmatprep.mubr.bf16.mxu0 %v183
  %408 = vmatmul.mubr.bf16.gmra.mrb[0].mxu0 %v182
  %v409 = vpop.f32.mrb[0].mxu0
  %v410 = vadd.f32 %v88, %v409
  %v411 = vpop.f32.mrb[0].mxu0
  %v412 = vpop.f32.mrb[0].mxu0
  %v413 = vadd.f32 %v88, %v412
  %v414 = vpop.f32.mrb[0].mxu0
  %415 = vmatprep.mubr.bf16.mxu0 %v186
  %416 = vmatmul.mubr.bf16.gmra.mrb[0].mxu0 %v185
  %v417 = vpop.f32.mrb[0].mxu0
  %v418 = vadd.f32 %v88, %v417
  %v419 = vpop.f32.mrb[0].mxu0
  %v420 = vpop.f32.mrb[0].mxu0
  %v421 = vadd.f32 %v88, %v420
  %v422 = vpop.f32.mrb[0].mxu0
  %423 = vmatprep.mubr.bf16.mxu0 %v189
  %424 = vmatmul.mubr.bf16.gmra.mrb[0].mxu0 %v188
  %v425 = vpop.f32.mrb[0].mxu0
  %v426 = vadd.f32 %v88, %v425
  %v427 = vpop.f32.mrb[0].mxu0
  %v428 = vpop.f32.mrb[0].mxu0
  %v429 = vadd.f32 %v88, %v428
  %v430 = vpop.f32.mrb[0].mxu0
  %431 = vmatprep.mubr.bf16.mxu0 %v192
  %432 = vmatmul.mubr.bf16.gmra.mrb[0].mxu0 %v191
  %v433 = vpop.f32.mrb[0].mxu0
  %v434 = vadd.f32 %v88, %v433
  %v435 = vpop.f32.mrb[0].mxu0
  %v436 = vpop.f32.mrb[0].mxu0
  %v437 = vadd.f32 %v88, %v436
  %v438 = vpop.f32.mrb[0].mxu0
  %439 = vdwg.mxu0
  %440 = vmatprep.subr.bf16.mxu0 0
  %441 = vmatpush1.bf16.msra.mxu0 %v298
  %442 = vmatprep.subr.bf16.mxu0 0
  %443 = vmatpush1.bf16.msra.mxu0 %v299
  %444 = vmatprep.subr.bf16.mxu0 0
  %445 = vmatpush1.bf16.msra.mxu0 0
  %446 = vmatprep.subr.bf16.mxu0 0
  %447 = vmatpush1.bf16.msra.mxu0 0
  %448 = vmatprep.subr.bf16.mxu0 0
  %449 = vmatpush1.bf16.msra.mxu0 0
  %450 = vmatprep.subr.bf16.mxu0 0
  %451 = vmatpush1.bf16.msra.mxu0 0
  %452 = vmatprep.subr.bf16.mxu0 0
  %453 = vmatpush1.bf16.msra.mxu0 0
  %454 = vmatprep.subr.bf16.mxu0 0
  %455 = vmatpush1.bf16.msra.mxu0 0
  %456 = vmatprep.subr.bf16.mxu0 0
  %457 = vmatpush1.bf16.msra.mxu0 0
  %458 = vmatprep.subr.bf16.mxu0 0
  %459 = vmatpush1.bf16.msra.mxu0 0
  %460 = vmatprep.subr.bf16.mxu0 0
  %461 = vmatpush1.bf16.msra.mxu0 0
  %462 = vmatprep.subr.bf16.mxu0 0
  %463 = vmatpush1.bf16.msra.mxu0 0
  %464 = vmatprep.subr.bf16.mxu0 0
  %465 = vmatpush1.bf16.msra.mxu0 0
  %466 = vmatprep.subr.bf16.mxu0 0
  %467 = vmatpush1.bf16.msra.mxu0 0
  %468 = vmatprep.subr.bf16.mxu0 0
  %469 = vmatpush1.bf16.msra.mxu0 0
  %470 = vmatprep.subr.bf16.mxu0 0
  %471 = vmatpush1.bf16.msra.mxu0 0
  %472 = vmatprep.mubr.bf16.mxu0 0
  %473 = vmatmul.mubr.bf16.gmra.mrb[0].mxu0 %v320
  %v474 = vpop.f32.mrb[0].mxu0
  %v475 = vadd.f32 %v378, %v474
  %v476 = vpop.f32.mrb[0].mxu0
  %v477 = vpop.f32.mrb[0].mxu0
  %v478 = vadd.f32 %v381, %v477
  %v479 = vpop.f32.mrb[0].mxu0
  %480 = vmatprep.mubr.bf16.mxu0 0
  %481 = vmatmul.mubr.bf16.gmra.mrb[0].mxu0 %v323
  %v482 = vpop.f32.mrb[0].mxu0
  %v483 = vadd.f32 %v386, %v482
  %v484 = vpop.f32.mrb[0].mxu0
  %v485 = vpop.f32.mrb[0].mxu0
  %v486 = vadd.f32 %v389, %v485
  %v487 = vpop.f32.mrb[0].mxu0
  %488 = vmatprep.mubr.bf16.mxu0 0
  %489 = vmatmul.mubr.bf16.gmra.mrb[0].mxu0 %v326
  %v490 = vpop.f32.mrb[0].mxu0
  %v491 = vadd.f32 %v394, %v490
  %v492 = vpop.f32.mrb[0].mxu0
  %v493 = vpop.f32.mrb[0].mxu0
  %v494 = vadd.f32 %v397, %v493
  %v495 = vpop.f32.mrb[0].mxu0
  %496 = vmatprep.mubr.bf16.mxu0 0
  %497 = vmatmul.mubr.bf16.gmra.mrb[0].mxu0 %v329
  %v498 = vpop.f32.mrb[0].mxu0
  %v499 = vadd.f32 %v402, %v498
  %v500 = vpop.f32.mrb[0].mxu0
  %v501 = vpop.f32.mrb[0].mxu0
  %v502 = vadd.f32 %v405, %v501
  %v503 = vpop.f32.mrb[0].mxu0
  %504 = vmatprep.mubr.bf16.mxu0 0
  %505 = vmatmul.mubr.bf16.gmra.mrb[0].mxu0 %v332
  %v506 = vpop.f32.mrb[0].mxu0
  %v507 = vadd.f32 %v410, %v506
  %v508 = vpop.f32.mrb[0].mxu0
  %v509 = vpop.f32.mrb[0].mxu0
  %v510 = vadd.f32 %v413, %v509
  %v511 = vpop.f32.mrb[0].mxu0
  %512 = vmatprep.mubr.bf16.mxu0 0
  %513 = vmatmul.mubr.bf16.gmra.mrb[0].mxu0 %v335
  %v514 = vpop.f32.mrb[0].mxu0
  %v515 = vadd.f32 %v418, %v514
  %v516 = vpop.f32.mrb[0].mxu0
  %v517 = vpop.f32.mrb[0].mxu0
  %v518 = vadd.f32 %v421, %v517
  %v519 = vpop.f32.mrb[0].mxu0
  %520 = vmatprep.mubr.bf16.mxu0 0
  %521 = vmatmul.mubr.bf16.gmra.mrb[0].mxu0 %v338
  %v522 = vpop.f32.mrb[0].mxu0
  %v523 = vadd.f32 %v426, %v522
  %v524 = vpop.f32.mrb[0].mxu0
  %v525 = vpop.f32.mrb[0].mxu0
  %v526 = vadd.f32 %v429, %v525
  %v527 = vpop.f32.mrb[0].mxu0
  %528 = vmatprep.mubr.bf16.mxu0 0
  %529 = vmatmul.mubr.bf16.gmra.mrb[0].mxu0 %v341
  %v530 = vpop.f32.mrb[0].mxu0
  %v531 = vadd.f32 %v434, %v530
  %v532 = vpop.f32.mrb[0].mxu0
  %v533 = vpop.f32.mrb[0].mxu0
  %v534 = vadd.f32 %v437, %v533
  %v535 = vpop.f32.mrb[0].mxu0
  %536 = vdwg.mxu0
  %v537 = vmax.f32 %v475, 0.0
  %v538 = vmax.f32 %v478, 0.0
  %v539 = vmax.f32 %v483, 0.0
  %v540 = vmax.f32 %v486, 0.0
  %v541 = vmax.f32 %v491, 0.0
  %v542 = vmax.f32 %v494, 0.0
  %v543 = vmax.f32 %v499, 0.0
  %v544 = vmax.f32 %v502, 0.0
  %v545 = vmax.f32 %v507, 0.0
  %v546 = vmax.f32 %v510, 0.0
  %v547 = vmax.f32 %v515, 0.0
  %v548 = vmax.f32 %v518, 0.0
  %v549 = vmax.f32 %v523, 0.0
  %v550 = vmax.f32 %v526, 0.0
  %v551 = vmax.f32 %v531, 0.0
  %v552 = vmax.f32 %v534, 0.0
  %v553 = vpack.c.bf16 %v538, %v537
  %v554 = vpack.c.bf16 %v540, %v539
  %v555 = vpack.c.bf16 %v542, %v541
  %v556 = vpack.c.bf16 %v544, %v543
  %v557 = vpack.c.bf16 %v546, %v545
  %v558 = vpack.c.bf16 %v548, %v547
  %v559 = vpack.c.bf16 %v550, %v549
  %v560 = vpack.c.bf16 %v552, %v551
  %v569 = vunpack.c.l.b16 %v553
  %v570 = vunpack.c.h.b16 %v553
  %v571 = vunpack.c.l.b16 %v554
  %v572 = vunpack.c.h.b16 %v554
  %v573 = vunpack.c.l.b16 %v555
  %v574 = vunpack.c.h.b16 %v555
  %v575 = vunpack.c.l.b16 %v556
  %v576 = vunpack.c.h.b16 %v556
  %v577 = vunpack.c.l.b16 %v557
  %v578 = vunpack.c.h.b16 %v557
  %v579 = vunpack.c.l.b16 %v558
  %v580 = vunpack.c.h.b16 %v558
  %v581 = vunpack.c.l.b16 %v559
  %v582 = vunpack.c.h.b16 %v559
  %v583 = vunpack.c.l.b16 %v560
  %v584 = vunpack.c.h.b16 %v560
  %v585 = vpack.c.b16 %v569, %v569
  %v586 = vpack.c.b16 %v570, %v570
  %v587 = vpack.c.b16 %v571, %v571
  %v588 = vpack.c.b16 %v572, %v572
  %v589 = vpack.c.b16 %v573, %v573
  %v590 = vpack.c.b16 %v574, %v574
  %v591 = vpack.c.b16 %v575, %v575
  %v592 = vpack.c.b16 %v576, %v576
  %v593 = vpack.c.b16 %v577, %v577
  %v594 = vpack.c.b16 %v578, %v578
  %v595 = vpack.c.b16 %v579, %v579
  %v596 = vpack.c.b16 %v580, %v580
  %v597 = vpack.c.b16 %v581, %v581
  %v598 = vpack.c.b16 %v582, %v582
  %v599 = vpack.c.b16 %v583, %v583
  %v600 = vpack.c.b16 %v584, %v584
  %vm617 = vcmask 257024
  %618 = vst.msk [vmem:[%s3] sm:$0xf] %vm617, %v585
  %619 = vst.msk [vmem:[%s3 + $0x4] sm:$0xf] %vm617, %v586
  %620 = vst.msk [vmem:[%s3 + $0x8] sm:$0xf] %vm617, %v587
  %621 = vst.msk [vmem:[%s3 + $0xc] sm:$0xf] %vm617, %v588
  %622 = vst.msk [vmem:[%s3 + $0x10] sm:$0xf] %vm617, %v589
  %623 = vst.msk [vmem:[%s3 + $0x14] sm:$0xf] %vm617, %v590
  %624 = vst.msk [vmem:[%s3 + $0x18] sm:$0xf] %vm617, %v591
  %625 = vst.msk [vmem:[%s3 + $0x1c] sm:$0xf] %vm617, %v592
  %626 = vst.msk [vmem:[%s3 + $0x20] sm:$0xf] %vm617, %v593
  %627 = vst.msk [vmem:[%s3 + $0x24] sm:$0xf] %vm617, %v594
  %628 = vst.msk [vmem:[%s3 + $0x28] sm:$0xf] %vm617, %v595
  %629 = vst.msk [vmem:[%s3 + $0x2c] sm:$0xf] %vm617, %v596
  %630 = vst.msk [vmem:[%s3 + $0x30] sm:$0xf] %vm617, %v597
  %631 = vst.msk [vmem:[%s3 + $0x34] sm:$0xf] %vm617, %v598
  %632 = vst.msk [vmem:[%s3 + $0x38] sm:$0xf] %vm617, %v599
  %633 = vst.msk [vmem:[%s3 + $0x3c] sm:$0xf] %vm617, %v600
  // Predicated region
  $region14: #{rpn_forward.10} parent=0 // pred_check
    _
  $region15: #{rpn_forward.10} parent=0 // pred_check_branch
    %635 = sbr.rel (0) target = $region17
  $region16: #{rpn_forward.10} parent=0 // pred_region
    _
  $region17: #{rpn_forward.10} parent=0 // pred_fallthru
    _
  // Predicated region
  $region18: #{rpn_forward.10} parent=0 // pred_check
    _
  $region19: #{rpn_forward.10} parent=0 // pred_check_branch
    %637 = sbr.rel (0) target = $region21
  $region20: #{rpn_forward.10} parent=0 // pred_region
    _
  $region21: #{rpn_forward.10} parent=0 // pred_fallthru
    _

// kernel: rpn_forward.13
$region0: #{rpn_forward.13}
  #allocation0 [shape = 'u32[]', space=smem, size = 0x4, offset = 0x4, fixed_abs, tag = 'smem constant byte address 0x4 - core index']
  #allocation1 [shape = 'u32[144,128]{1,0:T(1,128)}', space=vmem, size = 0x12000, scoped, tag = 'internal scratch']
  %s0 = inlined_call_operand.vmem [shape: bf16[32,288], index: 0, kind: input, shape index: {}]
  %s1 = inlined_call_operand.vmem [shape: bf16[288,32], index: 1, kind: input, shape index: {}]
  %s2 = inlined_call_operand.vmem [shape: f32[1,32], index: 2, kind: input, shape index: {}]
  %s3 = inlined_call_operand.vmem [shape: bf16[32,32], index: 3, kind: output, shape index: {}]
  %s4 = sld [smem:[#allocation0]]
  $region22: #{rpn_forward.13} parent=0
    _
  %s6 = ssub.s32 1, %s4
  %s7 = scalar_select 0, %s6, %s4
  // Predicated region
  $region2: #{rpn_forward.13} parent=0 // pred_check
    _
  $region3: #{rpn_forward.13} parent=0 // pred_check_branch
    %9 = sbr.rel (0) target = $region5
  $region4: #{rpn_forward.13} parent=0 // pred_region
    _
  $region5: #{rpn_forward.13} parent=0 // pred_fallthru
    _
  // Predicated region
  $region6: #{rpn_forward.13} parent=0 // pred_check
    _
  $region7: #{rpn_forward.13} parent=0 // pred_check_branch
    %11 = sbr.rel (0) target = $region9
  $region8: #{rpn_forward.13} parent=0 // pred_region
    _
  $region9: #{rpn_forward.13} parent=0 // pred_fallthru
    _
  // Predicated region
  $region10: #{rpn_forward.13} parent=0 // pred_check
    _
  $region11: #{rpn_forward.13} parent=0 // pred_check_branch
    %13 = sbr.rel (0) target = $region13
  $region12: #{rpn_forward.13} parent=0 // pred_region
    _
  $region13: #{rpn_forward.13} parent=0 // pred_fallthru
    _
  %v15 = vld [vmem:[%s0] sm:$0xff]
  %v16 = vld [vmem:[%s0 + $0x8] sm:$0xf]
  %v17 = vld [vmem:[%s0 + $0xc] sm:$0xff]
  %v18 = vld [vmem:[%s0 + $0x14] sm:$0xf]
  %v19 = vld [vmem:[%s0 + $0x18] sm:$0xff]
  %v20 = vld [vmem:[%s0 + $0x20] sm:$0xf]
  %v21 = vld [vmem:[%s0 + $0x24] sm:$0xff]
  %v22 = vld [vmem:[%s0 + $0x2c] sm:$0xf]
  %v23 = vld [vmem:[%s1] sm:$0xf]
  %v24 = vld [vmem:[%s1 + $0x4] sm:$0xf]
  %v25 = vld [vmem:[%s1 + $0x8] sm:$0xf]
  %v26 = vld [vmem:[%s1 + $0xc] sm:$0xf]
  %v27 = vld [vmem:[%s1 + $0x10] sm:$0xf]
  %v28 = vld [vmem:[%s1 + $0x14] sm:$0xf]
  %v29 = vld [vmem:[%s1 + $0x18] sm:$0xf]
  %v30 = vld [vmem:[%s1 + $0x1c] sm:$0xf]
  %v31 = vld [vmem:[%s1 + $0x20] sm:$0xf]
  %v32 = vld [vmem:[%s1 + $0x24] sm:$0xf]
  %v33 = vld [vmem:[%s1 + $0x28] sm:$0xf]
  %v34 = vld [vmem:[%s1 + $0x2c] sm:$0xf]
  %v35 = vld [vmem:[%s1 + $0x30] sm:$0xf]
  %v36 = vld [vmem:[%s1 + $0x34] sm:$0xf]
  %v37 = vld [vmem:[%s1 + $0x38] sm:$0xf]
  %v38 = vld [vmem:[%s1 + $0x3c] sm:$0xf]
  %v39 = vld [vmem:[%s1 + $0x40] sm:$0xf]
  %v40 = vld [vmem:[%s1 + $0x44] sm:$0xf]
  %v41 = vld [vmem:[%s1 + $0x48] sm:$0xf]
  %v42 = vld [vmem:[%s1 + $0x4c] sm:$0xf]
  %v43 = vld [vmem:[%s1 + $0x50] sm:$0xf]
  %v44 = vld [vmem:[%s1 + $0x54] sm:$0xf]
  %v45 = vld [vmem:[%s1 + $0x58] sm:$0xf]
  %v46 = vld [vmem:[%s1 + $0x5c] sm:$0xf]
  %v47 = vld [vmem:[%s1 + $0x60] sm:$0xf]
  %v48 = vld [vmem:[%s1 + $0x64] sm:$0xf]
  %v49 = vld [vmem:[%s1 + $0x68] sm:$0xf]
  %v50 = vld [vmem:[%s1 + $0x6c] sm:$0xf]
  %v51 = vld [vmem:[%s1 + $0x70] sm:$0xf]
  %v52 = vld [vmem:[%s1 + $0x74] sm:$0xf]
  %v53 = vld [vmem:[%s1 + $0x78] sm:$0xf]
  %v54 = vld [vmem:[%s1 + $0x7c] sm:$0xf]
  %v55 = vld [vmem:[%s1 + $0x80] sm:$0xf]
  %v56 = vld [vmem:[%s1 + $0x84] sm:$0xf]
  %v57 = vld [vmem:[%s1 + $0x88] sm:$0xf]
  %v58 = vld [vmem:[%s1 + $0x8c] sm:$0xf]
  %v59 = vld [vmem:[%s2] sm:$0x1]
  %v61 = vlaneseq
  %v62 = vshrl.u32 %v61, 7
  %v63 = vsub.s32 0, %v62
  %v64 = vrot.slane %v59, %v63
  %v74 = vunpack.c.l.b16 %v15
  %v75 = vunpack.c.h.b16 %v15
  %v76 = vunpack.c.l.b16 %v16
  %v77 = vunpack.c.l.b16 %v17
  %v78 = vunpack.c.h.b16 %v17
  %v79 = vunpack.c.l.b16 %v18
  %v80 = vunpack.c.l.b16 %v19
  %v81 = vunpack.c.h.b16 %v19
  %v82 = vunpack.c.l.b16 %v20
  %v83 = vunpack.c.l.b16 %v21
  %v84 = vunpack.c.h.b16 %v21
  %v85 = vunpack.c.l.b16 %v22
  %v86 = vpack.c.b16 %v77, %v74
  %v87 = vpack.c.b16 %v78, %v75
  %v88 = vpack.c.b16 %v79, %v76
  %v89 = vpack.c.b16 %v83, %v80
  %v90 = vpack.c.b16 %v84, %v81
  %v91 = vpack.c.b16 %v85, %v82
  %v132 = vunpack.c.l.b16 %v23
  %v133 = vunpack.c.l.b16 %v24
  %v134 = vunpack.c.l.b16 %v25
  %v135 = vunpack.c.l.b16 %v26
  %v136 = vunpack.c.l.b16 %v27
  %v137 = vunpack.c.l.b16 %v28
  %v138 = vunpack.c.l.b16 %v29
  %v139 = vunpack.c.l.b16 %v30
  %v140 = vunpack.c.l.b16 %v31
  %v141 = vunpack.c.l.b16 %v32
  %v142 = vunpack.c.l.b16 %v33
  %v143 = vunpack.c.l.b16 %v34
  %v144 = vunpack.c.l.b16 %v35
  %v145 = vunpack.c.l.b16 %v36
  %v146 = vunpack.c.l.b16 %v37
  %v147 = vunpack.c.l.b16 %v38
  %v148 = vunpack.c.l.b16 %v39
  %v149 = vunpack.c.l.b16 %v40
  %v150 = vunpack.c.l.b16 %v41
  %v151 = vunpack.c.l.b16 %v42
  %v152 = vunpack.c.l.b16 %v43
  %v153 = vunpack.c.l.b16 %v44
  %v154 = vunpack.c.l.b16 %v45
  %v155 = vunpack.c.l.b16 %v46
  %v156 = vunpack.c.l.b16 %v47
  %v157 = vunpack.c.l.b16 %v48
  %v158 = vunpack.c.l.b16 %v49
  %v159 = vunpack.c.l.b16 %v50
  %v160 = vunpack.c.l.b16 %v51
  %v161 = vunpack.c.l.b16 %v52
  %v162 = vunpack.c.l.b16 %v53
  %v163 = vunpack.c.l.b16 %v54
  %v164 = vunpack.c.l.b16 %v55
  %v165 = vunpack.c.l.b16 %v56
  %v166 = vunpack.c.l.b16 %v57
  %v167 = vunpack.c.l.b16 %v58
  %v168 = vpack.c.b16 %v133, %v132
  %v169 = vpack.c.b16 %v135, %v134
  %v170 = vpack.c.b16 %v137, %v136
  %v171 = vpack.c.b16 %v139, %v138
  %v172 = vpack.c.b16 %v141, %v140
  %v173 = vpack.c.b16 %v143, %v142
  %v174 = vpack.c.b16 %v145, %v144
  %v175 = vpack.c.b16 %v147, %v146
  %v176 = vpack.c.b16 %v149, %v148
  %v177 = vpack.c.b16 %v151, %v150
  %v178 = vpack.c.b16 %v153, %v152
  %v179 = vpack.c.b16 %v155, %v154
  %v180 = vpack.c.b16 %v157, %v156
  %v181 = vpack.c.b16 %v159, %v158
  %v182 = vpack.c.b16 %v161, %v160
  %v183 = vpack.c.b16 %v163, %v162
  %v184 = vpack.c.b16 %v165, %v164
  %v185 = vpack.c.b16 %v167, %v166
  %vm204 = vcmask 261120
  %v206 = vsel %vm204, %v88, 0
  %v209 = vsel %vm204, %v91, 0
  %211 = vmatprep.subr.bf16.mxu0 0
  %212 = vmatpush1.bf16.msra.mxu0 %v168
  %213 = vmatprep.subr.bf16.mxu0 0
  %214 = vmatpush1.bf16.msra.mxu0 %v169
  %215 = vmatprep.subr.bf16.mxu0 0
  %216 = vmatpush1.bf16.msra.mxu0 %v170
  %217 = vmatprep.subr.bf16.mxu0 0
  %218 = vmatpush1.bf16.msra.mxu0 %v171
  %219 = vmatprep.subr.bf16.mxu0 0
  %220 = vmatpush1.bf16.msra.mxu0 %v172
  %221 = vmatprep.subr.bf16.mxu0 0
  %222 = vmatpush1.bf16.msra.mxu0 %v173
  %223 = vmatprep.subr.bf16.mxu0 0
  %224 = vmatpush1.bf16.msra.mxu0 %v174
  %225 = vmatprep.subr.bf16.mxu0 0
  %226 = vmatpush1.bf16.msra.mxu0 %v175
  %227 = vmatprep.subr.bf16.mxu0 0
  %228 = vmatpush1.bf16.msra.mxu0 %v176
  %229 = vmatprep.subr.bf16.mxu0 0
  %230 = vmatpush1.bf16.msra.mxu0 %v177
  %231 = vmatprep.subr.bf16.mxu0 0
  %232 = vmatpush1.bf16.msra.mxu0 %v178
  %233 = vmatprep.subr.bf16.mxu0 0
  %234 = vmatpush1.bf16.msra.mxu0 %v179
  %235 = vmatprep.subr.bf16.mxu0 0
  %236 = vmatpush1.bf16.msra.mxu0 %v180
  %237 = vmatprep.subr.bf16.mxu0 0
  %238 = vmatpush1.bf16.msra.mxu0 %v181
  %239 = vmatprep.subr.bf16.mxu0 0
  %240 = vmatpush1.bf16.msra.mxu0 %v182
  %241 = vmatprep.subr.bf16.mxu0 0
  %242 = vmatpush1.bf16.msra.mxu0 %v183
  %243 = vmatprep.mubr.bf16.mxu0 %v87
  %244 = vmatmul.mubr.bf16.gmra.mrb[0].mxu0 %v86
  %v245 = vpop.f32.mrb[0].mxu0
  %v246 = vadd.f32 %v64, %v245
  %v247 = vpop.f32.mrb[0].mxu0
  %v248 = vpop.f32.mrb[0].mxu0
  %v249 = vadd.f32 %v64, %v248
  %v250 = vpop.f32.mrb[0].mxu0
  %251 = vmatprep.mubr.bf16.mxu0 %v90
  %252 = vmatmul.mubr.bf16.gmra.mrb[0].mxu0 %v89
  %v253 = vpop.f32.mrb[0].mxu0
  %v254 = vadd.f32 %v64, %v253
  %v255 = vpop.f32.mrb[0].mxu0
  %v256 = vpop.f32.mrb[0].mxu0
  %v257 = vadd.f32 %v64, %v256
  %v258 = vpop.f32.mrb[0].mxu0
  %259 = vdwg.mxu0
  %260 = vmatprep.subr.bf16.mxu0 0
  %261 = vmatpush1.bf16.msra.mxu0 %v184
  %262 = vmatprep.subr.bf16.mxu0 0
  %263 = vmatpush1.bf16.msra.mxu0 %v185
  %264 = vmatprep.subr.bf16.mxu0 0
  %265 = vmatpush1.bf16.msra.mxu0 0
  %266 = vmatprep.subr.bf16.mxu0 0
  %267 = vmatpush1.bf16.msra.mxu0 0
  %268 = vmatprep.subr.bf16.mxu0 0
  %269 = vmatpush1.bf16.msra.mxu0 0
  %270 = vmatprep.subr.bf16.mxu0 0
  %271 = vmatpush1.bf16.msra.mxu0 0
  %272 = vmatprep.subr.bf16.mxu0 0
  %273 = vmatpush1.bf16.msra.mxu0 0
  %274 = vmatprep.subr.bf16.mxu0 0
  %275 = vmatpush1.bf16.msra.mxu0 0
  %276 = vmatprep.subr.bf16.mxu0 0
  %277 = vmatpush1.bf16.msra.mxu0 0
  %278 = vmatprep.subr.bf16.mxu0 0
  %279 = vmatpush1.bf16.msra.mxu0 0
  %280 = vmatprep.subr.bf16.mxu0 0
  %281 = vmatpush1.bf16.msra.mxu0 0
  %282 = vmatprep.subr.bf16.mxu0 0
  %283 = vmatpush1.bf16.msra.mxu0 0
  %284 = vmatprep.subr.bf16.mxu0 0
  %285 = vmatpush1.bf16.msra.mxu0 0
  %286 = vmatprep.subr.bf16.mxu0 0
  %287 = vmatpush1.bf16.msra.mxu0 0
  %288 = vmatprep.subr.bf16.mxu0 0
  %289 = vmatpush1.bf16.msra.mxu0 0
  %290 = vmatprep.subr.bf16.mxu0 0
  %291 = vmatpush1.bf16.msra.mxu0 0
  %292 = vmatprep.mubr.bf16.mxu0 0
  %293 = vmatmul.mubr.bf16.gmra.mrb[0].mxu0 %v206
  %v294 = vpop.f32.mrb[0].mxu0
  %v295 = vadd.f32 %v246, %v294
  %v296 = vpop.f32.mrb[0].mxu0
  %v297 = vpop.f32.mrb[0].mxu0
  %v298 = vadd.f32 %v249, %v297
  %v299 = vpop.f32.mrb[0].mxu0
  %300 = vmatprep.mubr.bf16.mxu0 0
  %301 = vmatmul.mubr.bf16.gmra.mrb[0].mxu0 %v209
  %v302 = vpop.f32.mrb[0].mxu0
  %v303 = vadd.f32 %v254, %v302
  %v304 = vpop.f32.mrb[0].mxu0
  %v305 = vpop.f32.mrb[0].mxu0
  %v306 = vadd.f32 %v257, %v305
  %v307 = vpop.f32.mrb[0].mxu0
  %308 = vdwg.mxu0
  %v309 = vmax.f32 %v295, 0.0
  %v310 = vmax.f32 %v298, 0.0
  %v311 = vmax.f32 %v303, 0.0
  %v312 = vmax.f32 %v306, 0.0
  %v313 = vpack.c.bf16 %v310, %v309
  %v314 = vpack.c.bf16 %v312, %v311
  %v317 = vunpack.c.l.b16 %v313
  %v318 = vunpack.c.h.b16 %v313
  %v319 = vunpack.c.l.b16 %v314
  %v320 = vunpack.c.h.b16 %v314
  %v321 = vpack.c.b16 %v317, %v317
  %v322 = vpack.c.b16 %v318, %v318
  %v323 = vpack.c.b16 %v319, %v319
  %v324 = vpack.c.b16 %v320, %v320
  %vm329 = vcmask 257024
  %330 = vst.msk [vmem:[%s3] sm:$0xf] %vm329, %v321
  %331 = vst.msk [vmem:[%s3 + $0x4] sm:$0xf] %vm329, %v322
  %332 = vst.msk [vmem:[%s3 + $0x8] sm:$0xf] %vm329, %v323
  %333 = vst.msk [vmem:[%s3 + $0xc] sm:$0xf] %vm329, %v324
  // Predicated region
  $region14: #{rpn_forward.13} parent=0 // pred_check
    _
  $region15: #{rpn_forward.13} parent=0 // pred_check_branch
    %335 = sbr.rel (0) target = $region17
  $region16: #{rpn_forward.13} parent=0 // pred_region
    _
  $region17: #{rpn_forward.13} parent=0 // pred_fallthru
    _
  // Predicated region
  $region18: #{rpn_forward.13} parent=0 // pred_check
    _
  $region19: #{rpn_forward.13} parent=0 // pred_check_branch
    %337 = sbr.rel (0) target = $region21
  $region20: #{rpn_forward.13} parent=0 // pred_region
    _
  $region21: #{rpn_forward.13} parent=0 // pred_fallthru
    _

// kernel: rpn_forward.18
$region0: #{rpn_forward.18}
  #allocation0 [shape = 'u32[]', space=smem, size = 0x4, offset = 0x4, fixed_abs, tag = 'smem constant byte address 0x4 - core index']
  #allocation1 [shape = 'u32[144,128]{1,0:T(1,128)}', space=vmem, size = 0x12000, scoped, tag = 'internal scratch']
  %s0 = inlined_call_operand.vmem [shape: bf16[8,64], index: 0, kind: input, shape index: {}]
  %s1 = inlined_call_operand.vmem [shape: bf16[64,512], index: 1, kind: input, shape index: {}]
  %s2 = inlined_call_operand.vmem [shape: f32[1,512], index: 2, kind: input, shape index: {}]
  %s3 = inlined_call_operand.vmem [shape: bf16[8,512], index: 3, kind: output, shape index: {}]
  %s4 = sld [smem:[#allocation0]]
  $region22: #{rpn_forward.18} parent=0
    _
  %s6 = ssub.s32 1, %s4
  %s7 = scalar_select 0, %s6, %s4
  // Predicated region
  $region2: #{rpn_forward.18} parent=0 // pred_check
    _
  $region3: #{rpn_forward.18} parent=0 // pred_check_branch
    %9 = sbr.rel (0) target = $region5
  $region4: #{rpn_forward.18} parent=0 // pred_region
    _
  $region5: #{rpn_forward.18} parent=0 // pred_fallthru
    _
  // Predicated region
  $region6: #{rpn_forward.18} parent=0 // pred_check
    _
  $region7: #{rpn_forward.18} parent=0 // pred_check_branch
    %11 = sbr.rel (0) target = $region9
  $region8: #{rpn_forward.18} parent=0 // pred_region
    _
  $region9: #{rpn_forward.18} parent=0 // pred_fallthru
    _
  // Predicated region
  $region10: #{rpn_forward.18} parent=0 // pred_check
    _
  $region11: #{rpn_forward.18} parent=0 // pred_check_branch
    %13 = sbr.rel (0) target = $region13
  $region12: #{rpn_forward.18} parent=0 // pred_region
    _
  $region13: #{rpn_forward.18} parent=0 // pred_fallthru
    _
  %v15 = vld [vmem:[%s0] sm:$0xf]
  %v16 = vld [vmem:[%s1] sm:$0xff]
  %v17 = vld [vmem:[%s1 + $0x8] sm:$0xff]
  %v18 = vld [vmem:[%s1 + $0x10] sm:$0xff]
  %v19 = vld [vmem:[%s1 + $0x18] sm:$0xff]
  %v20 = vld [vmem:[%s1 + $0x20] sm:$0xff]
  %v21 = vld [vmem:[%s1 + $0x28] sm:$0xff]
  %v22 = vld [vmem:[%s1 + $0x30] sm:$0xff]
  %v23 = vld [vmem:[%s1 + $0x38] sm:$0xff]
  %v24 = vld [vmem:[%s1 + $0x40] sm:$0xff]
  %v25 = vld [vmem:[%s1 + $0x48] sm:$0xff]
  %v26 = vld [vmem:[%s1 + $0x50] sm:$0xff]
  %v27 = vld [vmem:[%s1 + $0x58] sm:$0xff]
  %v28 = vld [vmem:[%s1 + $0x60] sm:$0xff]
  %v29 = vld [vmem:[%s1 + $0x68] sm:$0xff]
  %v30 = vld [vmem:[%s1 + $0x70] sm:$0xff]
  %v31 = vld [vmem:[%s1 + $0x78] sm:$0xff]
  %v32 = vld [vmem:[%s2] sm:$0xf]
  %v34 = vlaneseq
  %v35 = vshrl.u32 %v34, 7
  %v36 = vsub.s32 0, %v35
  %v37 = vrot.slane %v32, %v36
  %v38 = vlaneseq
  %v39 = vshrl.u32 %v38, 7
  %v40 = vsub.s32 1, %v39
  %v41 = vrot.slane %v32, %v40
  %v42 = vlaneseq
  %v43 = vshrl.u32 %v42, 7
  %v44 = vsub.s32 2, %v43
  %v45 = vrot.slane %v32, %v44
  %v46 = vlaneseq
  %v47 = vshrl.u32 %v46, 7
  %v48 = vsub.s32 3, %v47
  %v49 = vrot.slane %v32, %v48
  %v70 = vunpack.c.l.b16 %v16
  %v71 = vunpack.c.h.b16 %v16
  %v72 = vunpack.c.l.b16 %v17
  %v73 = vunpack.c.h.b16 %v17
  %v74 = vunpack.c.l.b16 %v18
  %v75 = vunpack.c.h.b16 %v18
  %v76 = vunpack.c.l.b16 %v19
  %v77 = vunpack.c.h.b16 %v19
  %v78 = vunpack.c.l.b16 %v20
  %v79 = vunpack.c.h.b16 %v20
  %v80 = vunpack.c.l.b16 %v21
  %v81 = vunpack.c.h.b16 %v21
  %v82 = vunpack.c.l.b16 %v22
  %v83 = vunpack.c.h.b16 %v22
  %v84 = vunpack.c.l.b16 %v23
  %v85 = vunpack.c.h.b16 %v23
  %v86 = vunpack.c.l.b16 %v24
  %v87 = vunpack.c.h.b16 %v24
  %v88 = vunpack.c.l.b16 %v25
  %v89 = vunpack.c.h.b16 %v25
  %v90 = vunpack.c.l.b16 %v26
  %v91 = vunpack.c.h.b16 %v26
  %v92 = vunpack.c.l.b16 %v27
  %v93 = vunpack.c.h.b16 %v27
  %v94 = vunpack.c.l.b16 %v28
  %v95 = vunpack.c.h.b16 %v28
  %v96 = vunpack.c.l.b16 %v29
  %v97 = vunpack.c.h.b16 %v29
  %v98 = vunpack.c.l.b16 %v30
  %v99 = vunpack.c.h.b16 %v30
  %v100 = vunpack.c.l.b16 %v31
  %v101 = vunpack.c.h.b16 %v31
  %v102 = vpack.c.b16 %v74, %v70
  %v103 = vpack.c.b16 %v75, %v71
  %v104 = vpack.c.b16 %v76, %v72
  %v105 = vpack.c.b16 %v77, %v73
  %v106 = vpack.c.b16 %v82, %v78
  %v107 = vpack.c.b16 %v83, %v79
  %v108 = vpack.c.b16 %v84, %v80
  %v109 = vpack.c.b16 %v85, %v81
  %v110 = vpack.c.b16 %v90, %v86
  %v111 = vpack.c.b16 %v91, %v87
  %v112 = vpack.c.b16 %v92, %v88
  %v113 = vpack.c.b16 %v93, %v89
  %v114 = vpack.c.b16 %v98, %v94
  %v115 = vpack.c.b16 %v99, %v95
  %v116 = vpack.c.b16 %v100, %v96
  %v117 = vpack.c.b16 %v101, %v97
  %vm134 = vcmask 523264
  %v136 = vsel %vm134, %v15, 0
  %138 = vmatprep.subr.bf16.mxu0 %v103
  %139 = vmatpush1.bf16.msra.mxu0 %v102
  %140 = vmatprep.subr.bf16.mxu0 %v107
  %141 = vmatpush1.bf16.msra.mxu0 %v106
  %142 = vmatprep.subr.bf16.mxu0 %v111
  %143 = vmatpush1.bf16.msra.mxu0 %v110
  %144 = vmatprep.subr.bf16.mxu0 %v115
  %145 = vmatpush1.bf16.msra.mxu0 %v114
  %146 = vmatprep.subr.bf16.mxu0 0
  %147 = vmatpush1.bf16.msra.mxu0 0
  %148 = vmatprep.subr.bf16.mxu0 0
  %149 = vmatpush1.bf16.msra.mxu0 0
  %150 = vmatprep.subr.bf16.mxu0 0
  %151 = vmatpush1.bf16.msra.mxu0 0
  %152 = vmatprep.subr.bf16.mxu0 0
  %153 = vmatpush1.bf16.msra.mxu0 0
  %154 = vmatprep.subr.bf16.mxu0 0
  %155 = vmatpush1.bf16.msra.mxu0 0
  %156 = vmatprep.subr.bf16.mxu0 0
  %157 = vmatpush1.bf16.msra.mxu0 0
  %158 = vmatprep.subr.bf16.mxu0 0
  %159 = vmatpush1.bf16.msra.mxu0 0
  %160 = vmatprep.subr.bf16.mxu0 0
  %161 = vmatpush1.bf16.msra.mxu0 0
  %162 = vmatprep.subr.bf16.mxu0 0
  %163 = vmatpush1.bf16.msra.mxu0 0
  %164 = vmatprep.subr.bf16.mxu0 0
  %165 = vmatpush1.bf16.msra.mxu0 0
  %166 = vmatprep.subr.bf16.mxu0 0
  %167 = vmatpush1.bf16.msra.mxu0 0
  %168 = vmatprep.subr.bf16.mxu0 0
  %169 = vmatpush1.bf16.msra.mxu0 0
  %170 = vmatprep.mubr.bf16.mxu0 0
  %171 = vmatmul.mubr.bf16.gmra.mrb[0].mxu0 %v136
  %v172 = vpop.f32.mrb[0].mxu0
  %v173 = vadd.f32 %v37, %v172
  %v174 = vpop.f32.mrb[0].mxu0
  %v175 = vadd.f32 %v41, %v174
  %v176 = vpop.f32.mrb[0].mxu0
  %v177 = vpop.f32.mrb[0].mxu0
  %178 = vdwg.mxu0
  %179 = vmatprep.subr.bf16.mxu0 %v105
  %180 = vmatpush1.bf16.msra.mxu0 %v104
  %181 = vmatprep.subr.bf16.mxu0 %v109
  %182 = vmatpush1.bf16.msra.mxu0 %v108
  %183 = vmatprep.subr.bf16.mxu0 %v113
  %184 = vmatpush1.bf16.msra.mxu0 %v112
  %185 = vmatprep.subr.bf16.mxu0 %v117
  %186 = vmatpush1.bf16.msra.mxu0 %v116
  %187 = vmatprep.subr.bf16.mxu0 0
  %188 = vmatpush1.bf16.msra.mxu0 0
  %189 = vmatprep.subr.bf16.mxu0 0
  %190 = vmatpush1.bf16.msra.mxu0 0
  %191 = vmatprep.subr.bf16.mxu0 0
  %192 = vmatpush1.bf16.msra.mxu0 0
  %193 = vmatprep.subr.bf16.mxu0 0
  %194 = vmatpush1.bf16.msra.mxu0 0
  %195 = vmatprep.subr.bf16.mxu0 0
  %196 = vmatpush1.bf16.msra.mxu0 0
  %197 = vmatprep.subr.bf16.mxu0 0
  %198 = vmatpush1.bf16.msra.mxu0 0
  %199 = vmatprep.subr.bf16.mxu0 0
  %200 = vmatpush1.bf16.msra.mxu0 0
  %201 = vmatprep.subr.bf16.mxu0 0
  %202 = vmatpush1.bf16.msra.mxu0 0
  %203 = vmatprep.subr.bf16.mxu0 0
  %204 = vmatpush1.bf16.msra.mxu0 0
  %205 = vmatprep.subr.bf16.mxu0 0
  %206 = vmatpush1.bf16.msra.mxu0 0
  %207 = vmatprep.subr.bf16.mxu0 0
  %208 = vmatpush1.bf16.msra.mxu0 0
  %209 = vmatprep.subr.bf16.mxu0 0
  %210 = vmatpush1.bf16.msra.mxu0 0
  %211 = vmatprep.mubr.bf16.mxu0 0
  %212 = vmatmul.mubr.bf16.gmra.mrb[0].mxu0 %v136
  %v213 = vpop.f32.mrb[0].mxu0
  %v214 = vadd.f32 %v45, %v213
  %v215 = vpop.f32.mrb[0].mxu0
  %v216 = vadd.f32 %v49, %v215
  %v217 = vpop.f32.mrb[0].mxu0
  %v218 = vpop.f32.mrb[0].mxu0
  %219 = vdwg.mxu0
  %v220 = vmax.f32 %v173, 0.0
  %v221 = vmax.f32 %v175, 0.0
  %v222 = vmax.f32 %v214, 0.0
  %v223 = vmax.f32 %v216, 0.0
  %v224 = vpack.c.bf16 %v220, %v220
  %v225 = vpack.c.bf16 %v221, %v221
  %v226 = vpack.c.bf16 %v222, %v222
  %v227 = vpack.c.bf16 %v223, %v223
  %v232 = vunpack.c.l.b16 %v224
  %v233 = vunpack.c.l.b16 %v225
  %v234 = vunpack.c.l.b16 %v226
  %v235 = vunpack.c.l.b16 %v227
  %v236 = vpack.c.b16 %v233, %v232
  %v237 = vpack.c.b16 %v235, %v234
  %240 = vst [vmem:[%s3] sm:$0xff] %v236
  %241 = vst [vmem:[%s3 + $0x8] sm:$0xff] %v237
  // Predicated region
  $region14: #{rpn_forward.18} parent=0 // pred_check
    _
  $region15: #{rpn_forward.18} parent=0 // pred_check_branch
    %243 = sbr.rel (0) target = $region17
  $region16: #{rpn_forward.18} parent=0 // pred_region
    _
  $region17: #{rpn_forward.18} parent=0 // pred_fallthru
    _
  // Predicated region
  $region18: #{rpn_forward.18} parent=0 // pred_check
    _
  $region19: #{rpn_forward.18} parent=0 // pred_check_branch
    %245 = sbr.rel (0) target = $region21
  $region20: #{rpn_forward.18} parent=0 // pred_region
    _
  $region21: #{rpn_forward.18} parent=0 // pred_fallthru
    _

// kernel: rpn_forward.17
$region0: #{rpn_forward.17}
  #allocation0 [shape = 'u32[]', space=smem, size = 0x4, offset = 0x4, fixed_abs, tag = 'smem constant byte address 0x4 - core index']
  #allocation1 [shape = 'u32[144,128]{1,0:T(1,128)}', space=vmem, size = 0x12000, scoped, tag = 'internal scratch']
  %s0 = inlined_call_operand.vmem [shape: bf16[8,576], index: 0, kind: input, shape index: {}]
  %s1 = inlined_call_operand.vmem [shape: bf16[576,64], index: 1, kind: input, shape index: {}]
  %s2 = inlined_call_operand.vmem [shape: f32[1,64], index: 2, kind: input, shape index: {}]
  %s3 = inlined_call_operand.vmem [shape: bf16[8,64], index: 3, kind: output, shape index: {}]
  %s4 = sld [smem:[#allocation0]]
  $region22: #{rpn_forward.17} parent=0
    _
  %s6 = ssub.s32 1, %s4
  %s7 = scalar_select 0, %s6, %s4
  // Predicated region
  $region2: #{rpn_forward.17} parent=0 // pred_check
    _
  $region3: #{rpn_forward.17} parent=0 // pred_check_branch
    %9 = sbr.rel (0) target = $region5
  $region4: #{rpn_forward.17} parent=0 // pred_region
    _
  $region5: #{rpn_forward.17} parent=0 // pred_fallthru
    _
  // Predicated region
  $region6: #{rpn_forward.17} parent=0 // pred_check
    _
  $region7: #{rpn_forward.17} parent=0 // pred_check_branch
    %11 = sbr.rel (0) target = $region9
  $region8: #{rpn_forward.17} parent=0 // pred_region
    _
  $region9: #{rpn_forward.17} parent=0 // pred_fallthru
    _
  // Predicated region
  $region10: #{rpn_forward.17} parent=0 // pred_check
    _
  $region11: #{rpn_forward.17} parent=0 // pred_check_branch
    %13 = sbr.rel (0) target = $region13
  $region12: #{rpn_forward.17} parent=0 // pred_region
    _
  $region13: #{rpn_forward.17} parent=0 // pred_fallthru
    _
  %v15 = vld [vmem:[%s0] sm:$0xff]
  %v16 = vld [vmem:[%s0 + $0x8] sm:$0xff]
  %v17 = vld [vmem:[%s0 + $0x10] sm:$0xf]
  %v18 = vld [vmem:[%s1] sm:$0xf]
  %v19 = vld [vmem:[%s1 + $0x4] sm:$0xf]
  %v20 = vld [vmem:[%s1 + $0x8] sm:$0xf]
  %v21 = vld [vmem:[%s1 + $0xc] sm:$0xf]
  %v22 = vld [vmem:[%s1 + $0x10] sm:$0xf]
  %v23 = vld [vmem:[%s1 + $0x14] sm:$0xf]
  %v24 = vld [vmem:[%s1 + $0x18] sm:$0xf]
  %v25 = vld [vmem:[%s1 + $0x1c] sm:$0xf]
  %v26 = vld [vmem:[%s1 + $0x20] sm:$0xf]
  %v27 = vld [vmem:[%s1 + $0x24] sm:$0xf]
  %v28 = vld [vmem:[%s1 + $0x28] sm:$0xf]
  %v29 = vld [vmem:[%s1 + $0x2c] sm:$0xf]
  %v30 = vld [vmem:[%s1 + $0x30] sm:$0xf]
  %v31 = vld [vmem:[%s1 + $0x34] sm:$0xf]
  %v32 = vld [vmem:[%s1 + $0x38] sm:$0xf]
  %v33 = vld [vmem:[%s1 + $0x3c] sm:$0xf]
  %v34 = vld [vmem:[%s1 + $0x40] sm:$0xf]
  %v35 = vld [vmem:[%s1 + $0x44] sm:$0xf]
  %v36 = vld [vmem:[%s1 + $0x48] sm:$0xf]
  %v37 = vld [vmem:[%s1 + $0x4c] sm:$0xf]
  %v38 = vld [vmem:[%s1 + $0x50] sm:$0xf]
  %v39 = vld [vmem:[%s1 + $0x54] sm:$0xf]
  %v40 = vld [vmem:[%s1 + $0x58] sm:$0xf]
  %v41 = vld [vmem:[%s1 + $0x5c] sm:$0xf]
  %v42 = vld [vmem:[%s1 + $0x60] sm:$0xf]
  %v43 = vld [vmem:[%s1 + $0x64] sm:$0xf]
  %v44 = vld [vmem:[%s1 + $0x68] sm:$0xf]
  %v45 = vld [vmem:[%s1 + $0x6c] sm:$0xf]
  %v46 = vld [vmem:[%s1 + $0x70] sm:$0xf]
  %v47 = vld [vmem:[%s1 + $0x74] sm:$0xf]
  %v48 = vld [vmem:[%s1 + $0x78] sm:$0xf]
  %v49 = vld [vmem:[%s1 + $0x7c] sm:$0xf]
  %v50 = vld [vmem:[%s1 + $0x80] sm:$0xf]
  %v51 = vld [vmem:[%s1 + $0x84] sm:$0xf]
  %v52 = vld [vmem:[%s1 + $0x88] sm:$0xf]
  %v53 = vld [vmem:[%s1 + $0x8c] sm:$0xf]
  %v54 = vld [vmem:[%s1 + $0x90] sm:$0xf]
  %v55 = vld [vmem:[%s1 + $0x94] sm:$0xf]
  %v56 = vld [vmem:[%s1 + $0x98] sm:$0xf]
  %v57 = vld [vmem:[%s1 + $0x9c] sm:$0xf]
  %v58 = vld [vmem:[%s1 + $0xa0] sm:$0xf]
  %v59 = vld [vmem:[%s1 + $0xa4] sm:$0xf]
  %v60 = vld [vmem:[%s1 + $0xa8] sm:$0xf]
  %v61 = vld [vmem:[%s1 + $0xac] sm:$0xf]
  %v62 = vld [vmem:[%s1 + $0xb0] sm:$0xf]
  %v63 = vld [vmem:[%s1 + $0xb4] sm:$0xf]
  %v64 = vld [vmem:[%s1 + $0xb8] sm:$0xf]
  %v65 = vld [vmem:[%s1 + $0xbc] sm:$0xf]
  %v66 = vld [vmem:[%s1 + $0xc0] sm:$0xf]
  %v67 = vld [vmem:[%s1 + $0xc4] sm:$0xf]
  %v68 = vld [vmem:[%s1 + $0xc8] sm:$0xf]
  %v69 = vld [vmem:[%s1 + $0xcc] sm:$0xf]
  %v70 = vld [vmem:[%s1 + $0xd0] sm:$0xf]
  %v71 = vld [vmem:[%s1 + $0xd4] sm:$0xf]
  %v72 = vld [vmem:[%s1 + $0xd8] sm:$0xf]
  %v73 = vld [vmem:[%s1 + $0xdc] sm:$0xf]
  %v74 = vld [vmem:[%s1 + $0xe0] sm:$0xf]
  %v75 = vld [vmem:[%s1 + $0xe4] sm:$0xf]
  %v76 = vld [vmem:[%s1 + $0xe8] sm:$0xf]
  %v77 = vld [vmem:[%s1 + $0xec] sm:$0xf]
  %v78 = vld [vmem:[%s1 + $0xf0] sm:$0xf]
  %v79 = vld [vmem:[%s1 + $0xf4] sm:$0xf]
  %v80 = vld [vmem:[%s1 + $0xf8] sm:$0xf]
  %v81 = vld [vmem:[%s1 + $0xfc] sm:$0xf]
  %v82 = vld [vmem:[%s1 + $0x100] sm:$0xf]
  %v83 = vld [vmem:[%s1 + $0x104] sm:$0xf]
  %v84 = vld [vmem:[%s1 + $0x108] sm:$0xf]
  %v85 = vld [vmem:[%s1 + $0x10c] sm:$0xf]
  %v86 = vld [vmem:[%s1 + $0x110] sm:$0xf]
  %v87 = vld [vmem:[%s1 + $0x114] sm:$0xf]
  %v88 = vld [vmem:[%s1 + $0x118] sm:$0xf]
  %v89 = vld [vmem:[%s1 + $0x11c] sm:$0xf]
  %v90 = vld [vmem:[%s2] sm:$0x1]
  %v92 = vlaneseq
  %v93 = vshrl.u32 %v92, 7
  %v94 = vsub.s32 0, %v93
  %v95 = vrot.slane %v90, %v94
  %v100 = vunpack.c.l.b16 %v15
  %v101 = vunpack.c.h.b16 %v15
  %v102 = vunpack.c.l.b16 %v16
  %v103 = vunpack.c.h.b16 %v16
  %v104 = vunpack.c.l.b16 %v17
  %v105 = vpack.c.b16 %v100, %v100
  %v106 = vpack.c.b16 %v101, %v101
  %v107 = vpack.c.b16 %v102, %v102
  %v108 = vpack.c.b16 %v103, %v103
  %v109 = vpack.c.b16 %v104, %v104
  %v186 = vunpack.c.l.b16 %v18
  %v187 = vunpack.c.l.b16 %v19
  %v188 = vunpack.c.l.b16 %v20
  %v189 = vunpack.c.l.b16 %v21
  %v190 = vunpack.c.l.b16 %v22
  %v191 = vunpack.c.l.b16 %v23
  %v192 = vunpack.c.l.b16 %v24
  %v193 = vunpack.c.l.b16 %v25
  %v194 = vunpack.c.l.b16 %v26
  %v195 = vunpack.c.l.b16 %v27
  %v196 = vunpack.c.l.b16 %v28
  %v197 = vunpack.c.l.b16 %v29
  %v198 = vunpack.c.l.b16 %v30
  %v199 = vunpack.c.l.b16 %v31
  %v200 = vunpack.c.l.b16 %v32
  %v201 = vunpack.c.l.b16 %v33
  %v202 = vunpack.c.l.b16 %v34
  %v203 = vunpack.c.l.b16 %v35
  %v204 = vunpack.c.l.b16 %v36
  %v205 = vunpack.c.l.b16 %v37
  %v206 = vunpack.c.l.b16 %v38
  %v207 = vunpack.c.l.b16 %v39
  %v208 = vunpack.c.l.b16 %v40
  %v209 = vunpack.c.l.b16 %v41
  %v210 = vunpack.c.l.b16 %v42
  %v211 = vunpack.c.l.b16 %v43
  %v212 = vunpack.c.l.b16 %v44
  %v213 = vunpack.c.l.b16 %v45
  %v214 = vunpack.c.l.b16 %v46
  %v215 = vunpack.c.l.b16 %v47
  %v216 = vunpack.c.l.b16 %v48
  %v217 = vunpack.c.l.b16 %v49
  %v218 = vunpack.c.l.b16 %v50
  %v219 = vunpack.c.l.b16 %v51
  %v220 = vunpack.c.l.b16 %v52
  %v221 = vunpack.c.l.b16 %v53
  %v222 = vunpack.c.l.b16 %v54
  %v223 = vunpack.c.l.b16 %v55
  %v224 = vunpack.c.l.b16 %v56
  %v225 = vunpack.c.l.b16 %v57
  %v226 = vunpack.c.l.b16 %v58
  %v227 = vunpack.c.l.b16 %v59
  %v228 = vunpack.c.l.b16 %v60
  %v229 = vunpack.c.l.b16 %v61
  %v230 = vunpack.c.l.b16 %v62
  %v231 = vunpack.c.l.b16 %v63
  %v232 = vunpack.c.l.b16 %v64
  %v233 = vunpack.c.l.b16 %v65
  %v234 = vunpack.c.l.b16 %v66
  %v235 = vunpack.c.l.b16 %v67
  %v236 = vunpack.c.l.b16 %v68
  %v237 = vunpack.c.l.b16 %v69
  %v238 = vunpack.c.l.b16 %v70
  %v239 = vunpack.c.l.b16 %v71
  %v240 = vunpack.c.l.b16 %v72
  %v241 = vunpack.c.l.b16 %v73
  %v242 = vunpack.c.l.b16 %v74
  %v243 = vunpack.c.l.b16 %v75
  %v244 = vunpack.c.l.b16 %v76
  %v245 = vunpack.c.l.b16 %v77
  %v246 = vunpack.c.l.b16 %v78
  %v247 = vunpack.c.l.b16 %v79
  %v248 = vunpack.c.l.b16 %v80
  %v249 = vunpack.c.l.b16 %v81
  %v250 = vunpack.c.l.b16 %v82
  %v251 = vunpack.c.l.b16 %v83
  %v252 = vunpack.c.l.b16 %v84
  %v253 = vunpack.c.l.b16 %v85
  %v254 = vunpack.c.l.b16 %v86
  %v255 = vunpack.c.l.b16 %v87
  %v256 = vunpack.c.l.b16 %v88
  %v257 = vunpack.c.l.b16 %v89
  %v258 = vpack.c.b16 %v187, %v186
  %v259 = vpack.c.b16 %v189, %v188
  %v260 = vpack.c.b16 %v191, %v190
  %v261 = vpack.c.b16 %v193, %v192
  %v262 = vpack.c.b16 %v195, %v194
  %v263 = vpack.c.b16 %v197, %v196
  %v264 = vpack.c.b16 %v199, %v198
  %v265 = vpack.c.b16 %v201, %v200
  %v266 = vpack.c.b16 %v203, %v202
  %v267 = vpack.c.b16 %v205, %v204
  %v268 = vpack.c.b16 %v207, %v206
  %v269 = vpack.c.b16 %v209, %v208
  %v270 = vpack.c.b16 %v211, %v210
  %v271 = vpack.c.b16 %v213, %v212
  %v272 = vpack.c.b16 %v215, %v214
  %v273 = vpack.c.b16 %v217, %v216
  %v274 = vpack.c.b16 %v219, %v218
  %v275 = vpack.c.b16 %v221, %v220
  %v276 = vpack.c.b16 %v223, %v222
  %v277 = vpack.c.b16 %v225, %v224
  %v278 = vpack.c.b16 %v227, %v226
  %v279 = vpack.c.b16 %v229, %v228
  %v280 = vpack.c.b16 %v231, %v230
  %v281 = vpack.c.b16 %v233, %v232
  %v282 = vpack.c.b16 %v235, %v234
  %v283 = vpack.c.b16 %v237, %v236
  %v284 = vpack.c.b16 %v239, %v238
  %v285 = vpack.c.b16 %v241, %v240
  %v286 = vpack.c.b16 %v243, %v242
  %v287 = vpack.c.b16 %v245, %v244
  %v288 = vpack.c.b16 %v247, %v246
  %v289 = vpack.c.b16 %v249, %v248
  %v290 = vpack.c.b16 %v251, %v250
  %v291 = vpack.c.b16 %v253, %v252
  %v292 = vpack.c.b16 %v255, %v254
  %v293 = vpack.c.b16 %v257, %v256
  %vm330 = vcmask 523264
  %v332 = vsel %vm330, %v109, 0
  %334 = vmatprep.subr.bf16.mxu0 0
  %335 = vmatpush1.bf16.msra.mxu0 %v258
  %336 = vmatprep.subr.bf16.mxu0 0
  %337 = vmatpush1.bf16.msra.mxu0 %v259
  %338 = vmatprep.subr.bf16.mxu0 0
  %339 = vmatpush1.bf16.msra.mxu0 %v260
  %340 = vmatprep.subr.bf16.mxu0 0
  %341 = vmatpush1.bf16.msra.mxu0 %v261
  %342 = vmatprep.subr.bf16.mxu0 0
  %343 = vmatpush1.bf16.msra.mxu0 %v262
  %344 = vmatprep.subr.bf16.mxu0 0
  %345 = vmatpush1.bf16.msra.mxu0 %v263
  %346 = vmatprep.subr.bf16.mxu0 0
  %347 = vmatpush1.bf16.msra.mxu0 %v264
  %348 = vmatprep.subr.bf16.mxu0 0
  %349 = vmatpush1.bf16.msra.mxu0 %v265
  %350 = vmatprep.subr.bf16.mxu0 0
  %351 = vmatpush1.bf16.msra.mxu0 %v266
  %352 = vmatprep.subr.bf16.mxu0 0
  %353 = vmatpush1.bf16.msra.mxu0 %v267
  %354 = vmatprep.subr.bf16.mxu0 0
  %355 = vmatpush1.bf16.msra.mxu0 %v268
  %356 = vmatprep.subr.bf16.mxu0 0
  %357 = vmatpush1.bf16.msra.mxu0 %v269
  %358 = vmatprep.subr.bf16.mxu0 0
  %359 = vmatpush1.bf16.msra.mxu0 %v270
  %360 = vmatprep.subr.bf16.mxu0 0
  %361 = vmatpush1.bf16.msra.mxu0 %v271
  %362 = vmatprep.subr.bf16.mxu0 0
  %363 = vmatpush1.bf16.msra.mxu0 %v272
  %364 = vmatprep.subr.bf16.mxu0 0
  %365 = vmatpush1.bf16.msra.mxu0 %v273
  %366 = vmatprep.mubr.bf16.mxu0 %v106
  %367 = vmatmul.mubr.bf16.gmra.mrb[0].mxu0 %v105
  %v368 = vpop.f32.mrb[0].mxu0
  %v369 = vadd.f32 %v95, %v368
  %v370 = vpop.f32.mrb[0].mxu0
  %v371 = vpop.f32.mrb[0].mxu0
  %v372 = vpop.f32.mrb[0].mxu0
  %373 = vdwg.mxu0
  %374 = vmatprep.subr.bf16.mxu0 0
  %375 = vmatpush1.bf16.msra.mxu0 %v274
  %376 = vmatprep.subr.bf16.mxu0 0
  %377 = vmatpush1.bf16.msra.mxu0 %v275
  %378 = vmatprep.subr.bf16.mxu0 0
  %379 = vmatpush1.bf16.msra.mxu0 %v276
  %380 = vmatprep.subr.bf16.mxu0 0
  %381 = vmatpush1.bf16.msra.mxu0 %v277
  %382 = vmatprep.subr.bf16.mxu0 0
  %383 = vmatpush1.bf16.msra.mxu0 %v278
  %384 = vmatprep.subr.bf16.mxu0 0
  %385 = vmatpush1.bf16.msra.mxu0 %v279
  %386 = vmatprep.subr.bf16.mxu0 0
  %387 = vmatpush1.bf16.msra.mxu0 %v280
  %388 = vmatprep.subr.bf16.mxu0 0
  %389 = vmatpush1.bf16.msra.mxu0 %v281
  %390 = vmatprep.subr.bf16.mxu0 0
  %391 = vmatpush1.bf16.msra.mxu0 %v282
  %392 = vmatprep.subr.bf16.mxu0 0
  %393 = vmatpush1.bf16.msra.mxu0 %v283
  %394 = vmatprep.subr.bf16.mxu0 0
  %395 = vmatpush1.bf16.msra.mxu0 %v284
  %396 = vmatprep.subr.bf16.mxu0 0
  %397 = vmatpush1.bf16.msra.mxu0 %v285
  %398 = vmatprep.subr.bf16.mxu0 0
  %399 = vmatpush1.bf16.msra.mxu0 %v286
  %400 = vmatprep.subr.bf16.mxu0 0
  %401 = vmatpush1.bf16.msra.mxu0 %v287
  %402 = vmatprep.subr.bf16.mxu0 0
  %403 = vmatpush1.bf16.msra.mxu0 %v288
  %404 = vmatprep.subr.bf16.mxu0 0
  %405 = vmatpush1.bf16.msra.mxu0 %v289
  %406 = vmatprep.mubr.bf16.mxu0 %v108
  %407 = vmatmul.mubr.bf16.gmra.mrb[0].mxu0 %v107
  %v408 = vpop.f32.mrb[0].mxu0
  %v409 = vadd.f32 %v369, %v408
  %v410 = vpop.f32.mrb[0].mxu0
  %v411 = vpop.f32.mrb[0].mxu0
  %v412 = vpop.f32.mrb[0].mxu0
  %413 = vdwg.mxu0
  %414 = vmatprep.subr.bf16.mxu0 0
  %415 = vmatpush1.bf16.msra.mxu0 %v290
  %416 = vmatprep.subr.bf16.mxu0 0
  %417 = vmatpush1.bf16.msra.mxu0 %v291
  %418 = vmatprep.subr.bf16.mxu0 0
  %419 = vmatpush1.bf16.msra.mxu0 %v292
  %420 = vmatprep.subr.bf16.mxu0 0
  %421 = vmatpush1.bf16.msra.mxu0 %v293
  %422 = vmatprep.subr.bf16.mxu0 0
  %423 = vmatpush1.bf16.msra.mxu0 0
  %424 = vmatprep.subr.bf16.mxu0 0
  %425 = vmatpush1.bf16.msra.mxu0 0
  %426 = vmatprep.subr.bf16.mxu0 0
  %427 = vmatpush1.bf16.msra.mxu0 0
  %428 = vmatprep.subr.bf16.mxu0 0
  %429 = vmatpush1.bf16.msra.mxu0 0
  %430 = vmatprep.subr.bf16.mxu0 0
  %431 = vmatpush1.bf16.msra.mxu0 0
  %432 = vmatprep.subr.bf16.mxu0 0
  %433 = vmatpush1.bf16.msra.mxu0 0
  %434 = vmatprep.subr.bf16.mxu0 0
  %435 = vmatpush1.bf16.msra.mxu0 0
  %436 = vmatprep.subr.bf16.mxu0 0
  %437 = vmatpush1.bf16.msra.mxu0 0
  %438 = vmatprep.subr.bf16.mxu0 0
  %439 = vmatpush1.bf16.msra.mxu0 0
  %440 = vmatprep.subr.bf16.mxu0 0
  %441 = vmatpush1.bf16.msra.mxu0 0
  %442 = vmatprep.subr.bf16.mxu0 0
  %443 = vmatpush1.bf16.msra.mxu0 0
  %444 = vmatprep.subr.bf16.mxu0 0
  %445 = vmatpush1.bf16.msra.mxu0 0
  %446 = vmatprep.mubr.bf16.mxu0 0
  %447 = vmatmul.mubr.bf16.gmra.mrb[0].mxu0 %v332
  %v448 = vpop.f32.mrb[0].mxu0
  %v449 = vadd.f32 %v409, %v448
  %v450 = vpop.f32.mrb[0].mxu0
  %v451 = vpop.f32.mrb[0].mxu0
  %v452 = vpop.f32.mrb[0].mxu0
  %453 = vdwg.mxu0
  %v454 = vmax.f32 %v449, 0.0
  %v455 = vpack.c.bf16 %v454, %v454
  %vm456 = vcmask 519168
  %457 = vst.msk [vmem:[%s3] sm:$0xf] %vm456, %v455
  // Predicated region
  $region14: #{rpn_forward.17} parent=0 // pred_check
    _
  $region15: #{rpn_forward.17} parent=0 // pred_check_branch
    %459 = sbr.rel (0) target = $region17
  $region16: #{rpn_forward.17} parent=0 // pred_region
    _
  $region17: #{rpn_forward.17} parent=0 // pred_fallthru
    _
  // Predicated region
  $region18: #{rpn_forward.17} parent=0 // pred_check
    _
  $region19: #{rpn_forward.17} parent=0 // pred_check_branch
    %461 = sbr.rel (0) target = $region21
  $region20: #{rpn_forward.17} parent=0 // pred_region
    _
  $region21: #{rpn_forward.17} parent=0 // pred_fallthru
    _

// kernel: rpn_forward.16
$region0: #{rpn_forward.16}
  #allocation0 [shape = 'u32[]', space=smem, size = 0x4, offset = 0x4, fixed_abs, tag = 'smem constant byte address 0x4 - core index']
  #allocation1 [shape = 'u32[144,128]{1,0:T(1,128)}', space=vmem, size = 0x12000, scoped, tag = 'internal scratch']
  %s0 = inlined_call_operand.vmem [shape: bf16[8,288], index: 0, kind: input, shape index: {}]
  %s1 = inlined_call_operand.vmem [shape: bf16[288,64], index: 1, kind: input, shape index: {}]
  %s2 = inlined_call_operand.vmem [shape: f32[1,64], index: 2, kind: input, shape index: {}]
  %s3 = inlined_call_operand.vmem [shape: bf16[8,64], index: 3, kind: output, shape index: {}]
  %s4 = sld [smem:[#allocation0]]
  $region22: #{rpn_forward.16} parent=0
    _
  %s6 = ssub.s32 1, %s4
  %s7 = scalar_select 0, %s6, %s4
  // Predicated region
  $region2: #{rpn_forward.16} parent=0 // pred_check
    _
  $region3: #{rpn_forward.16} parent=0 // pred_check_branch
    %9 = sbr.rel (0) target = $region5
  $region4: #{rpn_forward.16} parent=0 // pred_region
    _
  $region5: #{rpn_forward.16} parent=0 // pred_fallthru
    _
  // Predicated region
  $region6: #{rpn_forward.16} parent=0 // pred_check
    _
  $region7: #{rpn_forward.16} parent=0 // pred_check_branch
    %11 = sbr.rel (0) target = $region9
  $region8: #{rpn_forward.16} parent=0 // pred_region
    _
  $region9: #{rpn_forward.16} parent=0 // pred_fallthru
    _
  // Predicated region
  $region10: #{rpn_forward.16} parent=0 // pred_check
    _
  $region11: #{rpn_forward.16} parent=0 // pred_check_branch
    %13 = sbr.rel (0) target = $region13
  $region12: #{rpn_forward.16} parent=0 // pred_region
    _
  $region13: #{rpn_forward.16} parent=0 // pred_fallthru
    _
  %v15 = vld [vmem:[%s0] sm:$0xff]
  %v16 = vld [vmem:[%s0 + $0x8] sm:$0xf]
  %v17 = vld [vmem:[%s1] sm:$0xf]
  %v18 = vld [vmem:[%s1 + $0x4] sm:$0xf]
  %v19 = vld [vmem:[%s1 + $0x8] sm:$0xf]
  %v20 = vld [vmem:[%s1 + $0xc] sm:$0xf]
  %v21 = vld [vmem:[%s1 + $0x10] sm:$0xf]
  %v22 = vld [vmem:[%s1 + $0x14] sm:$0xf]
  %v23 = vld [vmem:[%s1 + $0x18] sm:$0xf]
  %v24 = vld [vmem:[%s1 + $0x1c] sm:$0xf]
  %v25 = vld [vmem:[%s1 + $0x20] sm:$0xf]
  %v26 = vld [vmem:[%s1 + $0x24] sm:$0xf]
  %v27 = vld [vmem:[%s1 + $0x28] sm:$0xf]
  %v28 = vld [vmem:[%s1 + $0x2c] sm:$0xf]
  %v29 = vld [vmem:[%s1 + $0x30] sm:$0xf]
  %v30 = vld [vmem:[%s1 + $0x34] sm:$0xf]
  %v31 = vld [vmem:[%s1 + $0x38] sm:$0xf]
  %v32 = vld [vmem:[%s1 + $0x3c] sm:$0xf]
  %v33 = vld [vmem:[%s1 + $0x40] sm:$0xf]
  %v34 = vld [vmem:[%s1 + $0x44] sm:$0xf]
  %v35 = vld [vmem:[%s1 + $0x48] sm:$0xf]
  %v36 = vld [vmem:[%s1 + $0x4c] sm:$0xf]
  %v37 = vld [vmem:[%s1 + $0x50] sm:$0xf]
  %v38 = vld [vmem:[%s1 + $0x54] sm:$0xf]
  %v39 = vld [vmem:[%s1 + $0x58] sm:$0xf]
  %v40 = vld [vmem:[%s1 + $0x5c] sm:$0xf]
  %v41 = vld [vmem:[%s1 + $0x60] sm:$0xf]
  %v42 = vld [vmem:[%s1 + $0x64] sm:$0xf]
  %v43 = vld [vmem:[%s1 + $0x68] sm:$0xf]
  %v44 = vld [vmem:[%s1 + $0x6c] sm:$0xf]
  %v45 = vld [vmem:[%s1 + $0x70] sm:$0xf]
  %v46 = vld [vmem:[%s1 + $0x74] sm:$0xf]
  %v47 = vld [vmem:[%s1 + $0x78] sm:$0xf]
  %v48 = vld [vmem:[%s1 + $0x7c] sm:$0xf]
  %v49 = vld [vmem:[%s1 + $0x80] sm:$0xf]
  %v50 = vld [vmem:[%s1 + $0x84] sm:$0xf]
  %v51 = vld [vmem:[%s1 + $0x88] sm:$0xf]
  %v52 = vld [vmem:[%s1 + $0x8c] sm:$0xf]
  %v53 = vld [vmem:[%s2] sm:$0x1]
  %v55 = vlaneseq
  %v56 = vshrl.u32 %v55, 7
  %v57 = vsub.s32 0, %v56
  %v58 = vrot.slane %v53, %v57
  %v62 = vunpack.c.l.b16 %v15
  %v63 = vunpack.c.h.b16 %v15
  %v64 = vunpack.c.l.b16 %v16
  %v65 = vpack.c.b16 %v62, %v62
  %v66 = vpack.c.b16 %v63, %v63
  %v67 = vpack.c.b16 %v64, %v64
  %v106 = vunpack.c.l.b16 %v17
  %v107 = vunpack.c.l.b16 %v18
  %v108 = vunpack.c.l.b16 %v19
  %v109 = vunpack.c.l.b16 %v20
  %v110 = vunpack.c.l.b16 %v21
  %v111 = vunpack.c.l.b16 %v22
  %v112 = vunpack.c.l.b16 %v23
  %v113 = vunpack.c.l.b16 %v24
  %v114 = vunpack.c.l.b16 %v25
  %v115 = vunpack.c.l.b16 %v26
  %v116 = vunpack.c.l.b16 %v27
  %v117 = vunpack.c.l.b16 %v28
  %v118 = vunpack.c.l.b16 %v29
  %v119 = vunpack.c.l.b16 %v30
  %v120 = vunpack.c.l.b16 %v31
  %v121 = vunpack.c.l.b16 %v32
  %v122 = vunpack.c.l.b16 %v33
  %v123 = vunpack.c.l.b16 %v34
  %v124 = vunpack.c.l.b16 %v35
  %v125 = vunpack.c.l.b16 %v36
  %v126 = vunpack.c.l.b16 %v37
  %v127 = vunpack.c.l.b16 %v38
  %v128 = vunpack.c.l.b16 %v39
  %v129 = vunpack.c.l.b16 %v40
  %v130 = vunpack.c.l.b16 %v41
  %v131 = vunpack.c.l.b16 %v42
  %v132 = vunpack.c.l.b16 %v43
  %v133 = vunpack.c.l.b16 %v44
  %v134 = vunpack.c.l.b16 %v45
  %v135 = vunpack.c.l.b16 %v46
  %v136 = vunpack.c.l.b16 %v47
  %v137 = vunpack.c.l.b16 %v48
  %v138 = vunpack.c.l.b16 %v49
  %v139 = vunpack.c.l.b16 %v50
  %v140 = vunpack.c.l.b16 %v51
  %v141 = vunpack.c.l.b16 %v52
  %v142 = vpack.c.b16 %v107, %v106
  %v143 = vpack.c.b16 %v109, %v108
  %v144 = vpack.c.b16 %v111, %v110
  %v145 = vpack.c.b16 %v113, %v112
  %v146 = vpack.c.b16 %v115, %v114
  %v147 = vpack.c.b16 %v117, %v116
  %v148 = vpack.c.b16 %v119, %v118
  %v149 = vpack.c.b16 %v121, %v120
  %v150 = vpack.c.b16 %v123, %v122
  %v151 = vpack.c.b16 %v125, %v124
  %v152 = vpack.c.b16 %v127, %v126
  %v153 = vpack.c.b16 %v129, %v128
  %v154 = vpack.c.b16 %v131, %v130
  %v155 = vpack.c.b16 %v133, %v132
  %v156 = vpack.c.b16 %v135, %v134
  %v157 = vpack.c.b16 %v137, %v136
  %v158 = vpack.c.b16 %v139, %v138
  %v159 = vpack.c.b16 %v141, %v140
  %vm178 = vcmask 261120
  %v180 = vsel %vm178, %v67, 0
  %182 = vmatprep.subr.bf16.mxu0 0
  %183 = vmatpush1.bf16.msra.mxu0 %v142
  %184 = vmatprep.subr.bf16.mxu0 0
  %185 = vmatpush1.bf16.msra.mxu0 %v143
  %186 = vmatprep.subr.bf16.mxu0 0
  %187 = vmatpush1.bf16.msra.mxu0 %v144
  %188 = vmatprep.subr.bf16.mxu0 0
  %189 = vmatpush1.bf16.msra.mxu0 %v145
  %190 = vmatprep.subr.bf16.mxu0 0
  %191 = vmatpush1.bf16.msra.mxu0 %v146
  %192 = vmatprep.subr.bf16.mxu0 0
  %193 = vmatpush1.bf16.msra.mxu0 %v147
  %194 = vmatprep.subr.bf16.mxu0 0
  %195 = vmatpush1.bf16.msra.mxu0 %v148
  %196 = vmatprep.subr.bf16.mxu0 0
  %197 = vmatpush1.bf16.msra.mxu0 %v149
  %198 = vmatprep.subr.bf16.mxu0 0
  %199 = vmatpush1.bf16.msra.mxu0 %v150
  %200 = vmatprep.subr.bf16.mxu0 0
  %201 = vmatpush1.bf16.msra.mxu0 %v151
  %202 = vmatprep.subr.bf16.mxu0 0
  %203 = vmatpush1.bf16.msra.mxu0 %v152
  %204 = vmatprep.subr.bf16.mxu0 0
  %205 = vmatpush1.bf16.msra.mxu0 %v153
  %206 = vmatprep.subr.bf16.mxu0 0
  %207 = vmatpush1.bf16.msra.mxu0 %v154
  %208 = vmatprep.subr.bf16.mxu0 0
  %209 = vmatpush1.bf16.msra.mxu0 %v155
  %210 = vmatprep.subr.bf16.mxu0 0
  %211 = vmatpush1.bf16.msra.mxu0 %v156
  %212 = vmatprep.subr.bf16.mxu0 0
  %213 = vmatpush1.bf16.msra.mxu0 %v157
  %214 = vmatprep.mubr.bf16.mxu0 %v66
  %215 = vmatmul.mubr.bf16.gmra.mrb[0].mxu0 %v65
  %v216 = vpop.f32.mrb[0].mxu0
  %v217 = vadd.f32 %v58, %v216
  %v218 = vpop.f32.mrb[0].mxu0
  %v219 = vpop.f32.mrb[0].mxu0
  %v220 = vpop.f32.mrb[0].mxu0
  %221 = vdwg.mxu0
  %222 = vmatprep.subr.bf16.mxu0 0
  %223 = vmatpush1.bf16.msra.mxu0 %v158
  %224 = vmatprep.subr.bf16.mxu0 0
  %225 = vmatpush1.bf16.msra.mxu0 %v159
  %226 = vmatprep.subr.bf16.mxu0 0
  %227 = vmatpush1.bf16.msra.mxu0 0
  %228 = vmatprep.subr.bf16.mxu0 0
  %229 = vmatpush1.bf16.msra.mxu0 0
  %230 = vmatprep.subr.bf16.mxu0 0
  %231 = vmatpush1.bf16.msra.mxu0 0
  %232 = vmatprep.subr.bf16.mxu0 0
  %233 = vmatpush1.bf16.msra.mxu0 0
  %234 = vmatprep.subr.bf16.mxu0 0
  %235 = vmatpush1.bf16.msra.mxu0 0
  %236 = vmatprep.subr.bf16.mxu0 0
  %237 = vmatpush1.bf16.msra.mxu0 0
  %238 = vmatprep.subr.bf16.mxu0 0
  %239 = vmatpush1.bf16.msra.mxu0 0
  %240 = vmatprep.subr.bf16.mxu0 0
  %241 = vmatpush1.bf16.msra.mxu0 0
  %242 = vmatprep.subr.bf16.mxu0 0
  %243 = vmatpush1.bf16.msra.mxu0 0
  %244 = vmatprep.subr.bf16.mxu0 0
  %245 = vmatpush1.bf16.msra.mxu0 0
  %246 = vmatprep.subr.bf16.mxu0 0
  %247 = vmatpush1.bf16.msra.mxu0 0
  %248 = vmatprep.subr.bf16.mxu0 0
  %249 = vmatpush1.bf16.msra.mxu0 0
  %250 = vmatprep.subr.bf16.mxu0 0
  %251 = vmatpush1.bf16.msra.mxu0 0
  %252 = vmatprep.subr.bf16.mxu0 0
  %253 = vmatpush1.bf16.msra.mxu0 0
  %254 = vmatprep.mubr.bf16.mxu0 0
  %255 = vmatmul.mubr.bf16.gmra.mrb[0].mxu0 %v180
  %v256 = vpop.f32.mrb[0].mxu0
  %v257 = vadd.f32 %v217, %v256
  %v258 = vpop.f32.mrb[0].mxu0
  %v259 = vpop.f32.mrb[0].mxu0
  %v260 = vpop.f32.mrb[0].mxu0
  %261 = vdwg.mxu0
  %v262 = vmax.f32 %v257, 0.0
  %v263 = vpack.c.bf16 %v262, %v262
  %vm264 = vcmask 519168
  %265 = vst.msk [vmem:[%s3] sm:$0xf] %vm264, %v263
  // Predicated region
  $region14: #{rpn_forward.16} parent=0 // pred_check
    _
  $region15: #{rpn_forward.16} parent=0 // pred_check_branch
    %267 = sbr.rel (0) target = $region17
  $region16: #{rpn_forward.16} parent=0 // pred_region
    _
  $region17: #{rpn_forward.16} parent=0 // pred_fallthru
    _
  // Predicated region
  $region18: #{rpn_forward.16} parent=0 // pred_check
    _
  $region19: #{rpn_forward.16} parent=0 // pred_check_branch
    %269 = sbr.rel (0) target = $region21
  $region20: #{rpn_forward.16} parent=0 // pred_region
    _
  $region21: #{rpn_forward.16} parent=0 // pred_fallthru
    _

// kernel: rpn_forward.15
$region0: #{rpn_forward.15}
  #allocation0 [shape = 'u32[]', space=smem, size = 0x4, offset = 0x4, fixed_abs, tag = 'smem constant byte address 0x4 - core index']
  #allocation1 [shape = 'u32[144,128]{1,0:T(1,128)}', space=vmem, size = 0x12000, scoped, tag = 'internal scratch']
  %s0 = inlined_call_operand.vmem [shape: bf16[32,32], index: 0, kind: input, shape index: {}]
  %s1 = inlined_call_operand.vmem [shape: bf16[32,128], index: 1, kind: input, shape index: {}]
  %s2 = inlined_call_operand.vmem [shape: f32[1,128], index: 2, kind: input, shape index: {}]
  %s3 = inlined_call_operand.vmem [shape: bf16[32,128], index: 3, kind: output, shape index: {}]
  %s4 = sld [smem:[#allocation0]]
  $region22: #{rpn_forward.15} parent=0
    _
  %s6 = ssub.s32 1, %s4
  %s7 = scalar_select 0, %s6, %s4
  // Predicated region
  $region2: #{rpn_forward.15} parent=0 // pred_check
    _
  $region3: #{rpn_forward.15} parent=0 // pred_check_branch
    %9 = sbr.rel (0) target = $region5
  $region4: #{rpn_forward.15} parent=0 // pred_region
    _
  $region5: #{rpn_forward.15} parent=0 // pred_fallthru
    _
  // Predicated region
  $region6: #{rpn_forward.15} parent=0 // pred_check
    _
  $region7: #{rpn_forward.15} parent=0 // pred_check_branch
    %11 = sbr.rel (0) target = $region9
  $region8: #{rpn_forward.15} parent=0 // pred_region
    _
  $region9: #{rpn_forward.15} parent=0 // pred_fallthru
    _
  // Predicated region
  $region10: #{rpn_forward.15} parent=0 // pred_check
    _
  $region11: #{rpn_forward.15} parent=0 // pred_check_branch
    %13 = sbr.rel (0) target = $region13
  $region12: #{rpn_forward.15} parent=0 // pred_region
    _
  $region13: #{rpn_forward.15} parent=0 // pred_fallthru
    _
  %v15 = vld [vmem:[%s0] sm:$0xf]
  %v16 = vld [vmem:[%s0 + $0x4] sm:$0xf]
  %v17 = vld [vmem:[%s0 + $0x8] sm:$0xf]
  %v18 = vld [vmem:[%s0 + $0xc] sm:$0xf]
  %v19 = vld [vmem:[%s1] sm:$0xf]
  %v20 = vld [vmem:[%s1 + $0x4] sm:$0xf]
  %v21 = vld [vmem:[%s1 + $0x8] sm:$0xf]
  %v22 = vld [vmem:[%s1 + $0xc] sm:$0xf]
  %v23 = vld [vmem:[%s2] sm:$0x1]
  %v25 = vlaneseq
  %v26 = vshrl.u32 %v25, 7
  %v27 = vsub.s32 0, %v26
  %v28 = vrot.slane %v23, %v27
  %v34 = vunpack.c.l.b16 %v15
  %v35 = vunpack.c.l.b16 %v16
  %v36 = vunpack.c.l.b16 %v17
  %v37 = vunpack.c.l.b16 %v18
  %v38 = vpack.c.b16 %v35, %v34
  %v39 = vpack.c.b16 %v37, %v36
  %v44 = vunpack.c.l.b16 %v19
  %v45 = vunpack.c.l.b16 %v20
  %v46 = vunpack.c.l.b16 %v21
  %v47 = vunpack.c.l.b16 %v22
  %v48 = vpack.c.b16 %v45, %v44
  %v49 = vpack.c.b16 %v47, %v46
  %vm52 = vcmask 261120
  %v54 = vsel %vm52, %v38, 0
  %v57 = vsel %vm52, %v39, 0
  %59 = vmatprep.subr.bf16.mxu0 0
  %60 = vmatpush1.bf16.msra.mxu0 %v48
  %61 = vmatprep.subr.bf16.mxu0 0
  %62 = vmatpush1.bf16.msra.mxu0 %v49
  %63 = vmatprep.subr.bf16.mxu0 0
  %64 = vmatpush1.bf16.msra.mxu0 0
  %65 = vmatprep.subr.bf16.mxu0 0
  %66 = vmatpush1.bf16.msra.mxu0 0
  %67 = vmatprep.subr.bf16.mxu0 0
  %68 = vmatpush1.bf16.msra.mxu0 0
  %69 = vmatprep.subr.bf16.mxu0 0
  %70 = vmatpush1.bf16.msra.mxu0 0
  %71 = vmatprep.subr.bf16.mxu0 0
  %72 = vmatpush1.bf16.msra.mxu0 0
  %73 = vmatprep.subr.bf16.mxu0 0
  %74 = vmatpush1.bf16.msra.mxu0 0
  %75 = vmatprep.subr.bf16.mxu0 0
  %76 = vmatpush1.bf16.msra.mxu0 0
  %77 = vmatprep.subr.bf16.mxu0 0
  %78 = vmatpush1.bf16.msra.mxu0 0
  %79 = vmatprep.subr.bf16.mxu0 0
  %80 = vmatpush1.bf16.msra.mxu0 0
  %81 = vmatprep.subr.bf16.mxu0 0
  %82 = vmatpush1.bf16.msra.mxu0 0
  %83 = vmatprep.subr.bf16.mxu0 0
  %84 = vmatpush1.bf16.msra.mxu0 0
  %85 = vmatprep.subr.bf16.mxu0 0
  %86 = vmatpush1.bf16.msra.mxu0 0
  %87 = vmatprep.subr.bf16.mxu0 0
  %88 = vmatpush1.bf16.msra.mxu0 0
  %89 = vmatprep.subr.bf16.mxu0 0
  %90 = vmatpush1.bf16.msra.mxu0 0
  %91 = vmatprep.mubr.bf16.mxu0 0
  %92 = vmatmul.mubr.bf16.gmra.mrb[0].mxu0 %v54
  %v93 = vpop.f32.mrb[0].mxu0
  %v94 = vadd.f32 %v28, %v93
  %v95 = vpop.f32.mrb[0].mxu0
  %v96 = vpop.f32.mrb[0].mxu0
  %v97 = vadd.f32 %v28, %v96
  %v98 = vpop.f32.mrb[0].mxu0
  %99 = vmatprep.mubr.bf16.mxu0 0
  %100 = vmatmul.mubr.bf16.gmra.mrb[0].mxu0 %v57
  %v101 = vpop.f32.mrb[0].mxu0
  %v102 = vadd.f32 %v28, %v101
  %v103 = vpop.f32.mrb[0].mxu0
  %v104 = vpop.f32.mrb[0].mxu0
  %v105 = vadd.f32 %v28, %v104
  %v106 = vpop.f32.mrb[0].mxu0
  %107 = vdwg.mxu0
  %v108 = vmax.f32 %v94, 0.0
  %v109 = vmax.f32 %v97, 0.0
  %v110 = vmax.f32 %v102, 0.0
  %v111 = vmax.f32 %v105, 0.0
  %v112 = vpack.c.bf16 %v109, %v108
  %v113 = vpack.c.bf16 %v111, %v110
  %v116 = vunpack.c.l.b16 %v112
  %v117 = vunpack.c.h.b16 %v112
  %v118 = vunpack.c.l.b16 %v113
  %v119 = vunpack.c.h.b16 %v113
  %v120 = vpack.c.b16 %v116, %v116
  %v121 = vpack.c.b16 %v117, %v117
  %v122 = vpack.c.b16 %v118, %v118
  %v123 = vpack.c.b16 %v119, %v119
  %128 = vst [vmem:[%s3] sm:$0xf] %v120
  %129 = vst [vmem:[%s3 + $0x4] sm:$0xf] %v121
  %130 = vst [vmem:[%s3 + $0x8] sm:$0xf] %v122
  %131 = vst [vmem:[%s3 + $0xc] sm:$0xf] %v123
  // Predicated region
  $region14: #{rpn_forward.15} parent=0 // pred_check
    _
  $region15: #{rpn_forward.15} parent=0 // pred_check_branch
    %133 = sbr.rel (0) target = $region17
  $region16: #{rpn_forward.15} parent=0 // pred_region
    _
  $region17: #{rpn_forward.15} parent=0 // pred_fallthru
    _
  // Predicated region
  $region18: #{rpn_forward.15} parent=0 // pred_check
    _
  $region19: #{rpn_forward.15} parent=0 // pred_check_branch
    %135 = sbr.rel (0) target = $region21
  $region20: #{rpn_forward.15} parent=0 // pred_region
    _
  $region21: #{rpn_forward.15} parent=0 // pred_fallthru
    _

// kernel: rpn_forward.12
$region0: #{rpn_forward.12}
  #allocation0 [shape = 'u32[]', space=smem, size = 0x4, offset = 0x4, fixed_abs, tag = 'smem constant byte address 0x4 - core index']
  #allocation1 [shape = 'u32[144,128]{1,0:T(1,128)}', space=vmem, size = 0x12000, scoped, tag = 'internal scratch']
  %s0 = inlined_call_operand.vmem [shape: bf16[128,32], index: 0, kind: input, shape index: {}]
  %s1 = inlined_call_operand.vmem [shape: bf16[32,32], index: 1, kind: input, shape index: {}]
  %s2 = inlined_call_operand.vmem [shape: f32[1,32], index: 2, kind: input, shape index: {}]
  %s3 = inlined_call_operand.vmem [shape: bf16[128,32], index: 3, kind: output, shape index: {}]
  %s4 = sld [smem:[#allocation0]]
  $region22: #{rpn_forward.12} parent=0
    _
  %s6 = ssub.s32 1, %s4
  %s7 = scalar_select 0, %s6, %s4
  // Predicated region
  $region2: #{rpn_forward.12} parent=0 // pred_check
    _
  $region3: #{rpn_forward.12} parent=0 // pred_check_branch
    %9 = sbr.rel (0) target = $region5
  $region4: #{rpn_forward.12} parent=0 // pred_region
    _
  $region5: #{rpn_forward.12} parent=0 // pred_fallthru
    _
  // Predicated region
  $region6: #{rpn_forward.12} parent=0 // pred_check
    _
  $region7: #{rpn_forward.12} parent=0 // pred_check_branch
    %11 = sbr.rel (0) target = $region9
  $region8: #{rpn_forward.12} parent=0 // pred_region
    _
  $region9: #{rpn_forward.12} parent=0 // pred_fallthru
    _
  // Predicated region
  $region10: #{rpn_forward.12} parent=0 // pred_check
    _
  $region11: #{rpn_forward.12} parent=0 // pred_check_branch
    %13 = sbr.rel (0) target = $region13
  $region12: #{rpn_forward.12} parent=0 // pred_region
    _
  $region13: #{rpn_forward.12} parent=0 // pred_fallthru
    _
  %v15 = vld [vmem:[%s0] sm:$0xf]
  %v16 = vld [vmem:[%s0 + $0x4] sm:$0xf]
  %v17 = vld [vmem:[%s0 + $0x8] sm:$0xf]
  %v18 = vld [vmem:[%s0 + $0xc] sm:$0xf]
  %v19 = vld [vmem:[%s0 + $0x10] sm:$0xf]
  %v20 = vld [vmem:[%s0 + $0x14] sm:$0xf]
  %v21 = vld [vmem:[%s0 + $0x18] sm:$0xf]
  %v22 = vld [vmem:[%s0 + $0x1c] sm:$0xf]
  %v23 = vld [vmem:[%s0 + $0x20] sm:$0xf]
  %v24 = vld [vmem:[%s0 + $0x24] sm:$0xf]
  %v25 = vld [vmem:[%s0 + $0x28] sm:$0xf]
  %v26 = vld [vmem:[%s0 + $0x2c] sm:$0xf]
  %v27 = vld [vmem:[%s0 + $0x30] sm:$0xf]
  %v28 = vld [vmem:[%s0 + $0x34] sm:$0xf]
  %v29 = vld [vmem:[%s0 + $0x38] sm:$0xf]
  %v30 = vld [vmem:[%s0 + $0x3c] sm:$0xf]
  %v31 = vld [vmem:[%s1] sm:$0xf]
  %v32 = vld [vmem:[%s1 + $0x4] sm:$0xf]
  %v33 = vld [vmem:[%s1 + $0x8] sm:$0xf]
  %v34 = vld [vmem:[%s1 + $0xc] sm:$0xf]
  %v35 = vld [vmem:[%s2] sm:$0x1]
  %v37 = vlaneseq
  %v38 = vshrl.u32 %v37, 7
  %v39 = vsub.s32 0, %v38
  %v40 = vrot.slane %v35, %v39
  %v58 = vunpack.c.l.b16 %v15
  %v59 = vunpack.c.l.b16 %v16
  %v60 = vunpack.c.l.b16 %v17
  %v61 = vunpack.c.l.b16 %v18
  %v62 = vunpack.c.l.b16 %v19
  %v63 = vunpack.c.l.b16 %v20
  %v64 = vunpack.c.l.b16 %v21
  %v65 = vunpack.c.l.b16 %v22
  %v66 = vunpack.c.l.b16 %v23
  %v67 = vunpack.c.l.b16 %v24
  %v68 = vunpack.c.l.b16 %v25
  %v69 = vunpack.c.l.b16 %v26
  %v70 = vunpack.c.l.b16 %v27
  %v71 = vunpack.c.l.b16 %v28
  %v72 = vunpack.c.l.b16 %v29
  %v73 = vunpack.c.l.b16 %v30
  %v74 = vpack.c.b16 %v59, %v58
  %v75 = vpack.c.b16 %v61, %v60
  %v76 = vpack.c.b16 %v63, %v62
  %v77 = vpack.c.b16 %v65, %v64
  %v78 = vpack.c.b16 %v67, %v66
  %v79 = vpack.c.b16 %v69, %v68
  %v80 = vpack.c.b16 %v71, %v70
  %v81 = vpack.c.b16 %v73, %v72
  %v86 = vunpack.c.l.b16 %v31
  %v87 = vunpack.c.l.b16 %v32
  %v88 = vunpack.c.l.b16 %v33
  %v89 = vunpack.c.l.b16 %v34
  %v90 = vpack.c.b16 %v87, %v86
  %v91 = vpack.c.b16 %v89, %v88
  %vm94 = vcmask 261120
  %v96 = vsel %vm94, %v74, 0
  %v99 = vsel %vm94, %v75, 0
  %v102 = vsel %vm94, %v76, 0
  %v105 = vsel %vm94, %v77, 0
  %v108 = vsel %vm94, %v78, 0
  %v111 = vsel %vm94, %v79, 0
  %v114 = vsel %vm94, %v80, 0
  %v117 = vsel %vm94, %v81, 0
  %119 = vmatprep.subr.bf16.mxu0 0
  %120 = vmatpush1.bf16.msra.mxu0 %v90
  %121 = vmatprep.subr.bf16.mxu0 0
  %122 = vmatpush1.bf16.msra.mxu0 %v91
  %123 = vmatprep.subr.bf16.mxu0 0
  %124 = vmatpush1.bf16.msra.mxu0 0
  %125 = vmatprep.subr.bf16.mxu0 0
  %126 = vmatpush1.bf16.msra.mxu0 0
  %127 = vmatprep.subr.bf16.mxu0 0
  %128 = vmatpush1.bf16.msra.mxu0 0
  %129 = vmatprep.subr.bf16.mxu0 0
  %130 = vmatpush1.bf16.msra.mxu0 0
  %131 = vmatprep.subr.bf16.mxu0 0
  %132 = vmatpush1.bf16.msra.mxu0 0
  %133 = vmatprep.subr.bf16.mxu0 0
  %134 = vmatpush1.bf16.msra.mxu0 0
  %135 = vmatprep.subr.bf16.mxu0 0
  %136 = vmatpush1.bf16.msra.mxu0 0
  %137 = vmatprep.subr.bf16.mxu0 0
  %138 = vmatpush1.bf16.msra.mxu0 0
  %139 = vmatprep.subr.bf16.mxu0 0
  %140 = vmatpush1.bf16.msra.mxu0 0
  %141 = vmatprep.subr.bf16.mxu0 0
  %142 = vmatpush1.bf16.msra.mxu0 0
  %143 = vmatprep.subr.bf16.mxu0 0
  %144 = vmatpush1.bf16.msra.mxu0 0
  %145 = vmatprep.subr.bf16.mxu0 0
  %146 = vmatpush1.bf16.msra.mxu0 0
  %147 = vmatprep.subr.bf16.mxu0 0
  %148 = vmatpush1.bf16.msra.mxu0 0
  %149 = vmatprep.subr.bf16.mxu0 0
  %150 = vmatpush1.bf16.msra.mxu0 0
  %151 = vmatprep.mubr.bf16.mxu0 0
  %152 = vmatmul.mubr.bf16.gmra.mrb[0].mxu0 %v96
  %v153 = vpop.f32.mrb[0].mxu0
  %v154 = vadd.f32 %v40, %v153
  %v155 = vpop.f32.mrb[0].mxu0
  %v156 = vpop.f32.mrb[0].mxu0
  %v157 = vadd.f32 %v40, %v156
  %v158 = vpop.f32.mrb[0].mxu0
  %159 = vmatprep.mubr.bf16.mxu0 0
  %160 = vmatmul.mubr.bf16.gmra.mrb[0].mxu0 %v99
  %v161 = vpop.f32.mrb[0].mxu0
  %v162 = vadd.f32 %v40, %v161
  %v163 = vpop.f32.mrb[0].mxu0
  %v164 = vpop.f32.mrb[0].mxu0
  %v165 = vadd.f32 %v40, %v164
  %v166 = vpop.f32.mrb[0].mxu0
  %167 = vmatprep.mubr.bf16.mxu0 0
  %168 = vmatmul.mubr.bf16.gmra.mrb[0].mxu0 %v102
  %v169 = vpop.f32.mrb[0].mxu0
  %v170 = vadd.f32 %v40, %v169
  %v171 = vpop.f32.mrb[0].mxu0
  %v172 = vpop.f32.mrb[0].mxu0
  %v173 = vadd.f32 %v40, %v172
  %v174 = vpop.f32.mrb[0].mxu0
  %175 = vmatprep.mubr.bf16.mxu0 0
  %176 = vmatmul.mubr.bf16.gmra.mrb[0].mxu0 %v105
  %v177 = vpop.f32.mrb[0].mxu0
  %v178 = vadd.f32 %v40, %v177
  %v179 = vpop.f32.mrb[0].mxu0
  %v180 = vpop.f32.mrb[0].mxu0
  %v181 = vadd.f32 %v40, %v180
  %v182 = vpop.f32.mrb[0].mxu0
  %183 = vmatprep.mubr.bf16.mxu0 0
  %184 = vmatmul.mubr.bf16.gmra.mrb[0].mxu0 %v108
  %v185 = vpop.f32.mrb[0].mxu0
  %v186 = vadd.f32 %v40, %v185
  %v187 = vpop.f32.mrb[0].mxu0
  %v188 = vpop.f32.mrb[0].mxu0
  %v189 = vadd.f32 %v40, %v188
  %v190 = vpop.f32.mrb[0].mxu0
  %191 = vmatprep.mubr.bf16.mxu0 0
  %192 = vmatmul.mubr.bf16.gmra.mrb[0].mxu0 %v111
  %v193 = vpop.f32.mrb[0].mxu0
  %v194 = vadd.f32 %v40, %v193
  %v195 = vpop.f32.mrb[0].mxu0
  %v196 = vpop.f32.mrb[0].mxu0
  %v197 = vadd.f32 %v40, %v196
  %v198 = vpop.f32.mrb[0].mxu0
  %199 = vmatprep.mubr.bf16.mxu0 0
  %200 = vmatmul.mubr.bf16.gmra.mrb[0].mxu0 %v114
  %v201 = vpop.f32.mrb[0].mxu0
  %v202 = vadd.f32 %v40, %v201
  %v203 = vpop.f32.mrb[0].mxu0
  %v204 = vpop.f32.mrb[0].mxu0
  %v205 = vadd.f32 %v40, %v204
  %v206 = vpop.f32.mrb[0].mxu0
  %207 = vmatprep.mubr.bf16.mxu0 0
  %208 = vmatmul.mubr.bf16.gmra.mrb[0].mxu0 %v117
  %v209 = vpop.f32.mrb[0].mxu0
  %v210 = vadd.f32 %v40, %v209
  %v211 = vpop.f32.mrb[0].mxu0
  %v212 = vpop.f32.mrb[0].mxu0
  %v213 = vadd.f32 %v40, %v212
  %v214 = vpop.f32.mrb[0].mxu0
  %215 = vdwg.mxu0
  %v216 = vmax.f32 %v154, 0.0
  %v217 = vmax.f32 %v157, 0.0
  %v218 = vmax.f32 %v162, 0.0
  %v219 = vmax.f32 %v165, 0.0
  %v220 = vmax.f32 %v170, 0.0
  %v221 = vmax.f32 %v173, 0.0
  %v222 = vmax.f32 %v178, 0.0
  %v223 = vmax.f32 %v181, 0.0
  %v224 = vmax.f32 %v186, 0.0
  %v225 = vmax.f32 %v189, 0.0
  %v226 = vmax.f32 %v194, 0.0
  %v227 = vmax.f32 %v197, 0.0
  %v228 = vmax.f32 %v202, 0.0
  %v229 = vmax.f32 %v205, 0.0
  %v230 = vmax.f32 %v210, 0.0
  %v231 = vmax.f32 %v213, 0.0
  %v232 = vpack.c.bf16 %v217, %v216
  %v233 = vpack.c.bf16 %v219, %v218
  %v234 = vpack.c.bf16 %v221, %v220
  %v235 = vpack.c.bf16 %v223, %v222
  %v236 = vpack.c.bf16 %v225, %v224
  %v237 = vpack.c.bf16 %v227, %v226
  %v238 = vpack.c.bf16 %v229, %v228
  %v239 = vpack.c.bf16 %v231, %v230
  %v248 = vunpack.c.l.b16 %v232
  %v249 = vunpack.c.h.b16 %v232
  %v250 = vunpack.c.l.b16 %v233
  %v251 = vunpack.c.h.b16 %v233
  %v252 = vunpack.c.l.b16 %v234
  %v253 = vunpack.c.h.b16 %v234
  %v254 = vunpack.c.l.b16 %v235
  %v255 = vunpack.c.h.b16 %v235
  %v256 = vunpack.c.l.b16 %v236
  %v257 = vunpack.c.h.b16 %v236
  %v258 = vunpack.c.l.b16 %v237
  %v259 = vunpack.c.h.b16 %v237
  %v260 = vunpack.c.l.b16 %v238
  %v261 = vunpack.c.h.b16 %v238
  %v262 = vunpack.c.l.b16 %v239
  %v263 = vunpack.c.h.b16 %v239
  %v264 = vpack.c.b16 %v248, %v248
  %v265 = vpack.c.b16 %v249, %v249
  %v266 = vpack.c.b16 %v250, %v250
  %v267 = vpack.c.b16 %v251, %v251
  %v268 = vpack.c.b16 %v252, %v252
  %v269 = vpack.c.b16 %v253, %v253
  %v270 = vpack.c.b16 %v254, %v254
  %v271 = vpack.c.b16 %v255, %v255
  %v272 = vpack.c.b16 %v256, %v256
  %v273 = vpack.c.b16 %v257, %v257
  %v274 = vpack.c.b16 %v258, %v258
  %v275 = vpack.c.b16 %v259, %v259
  %v276 = vpack.c.b16 %v260, %v260
  %v277 = vpack.c.b16 %v261, %v261
  %v278 = vpack.c.b16 %v262, %v262
  %v279 = vpack.c.b16 %v263, %v263
  %vm296 = vcmask 257024
  %297 = vst.msk [vmem:[%s3] sm:$0xf] %vm296, %v264
  %298 = vst.msk [vmem:[%s3 + $0x4] sm:$0xf] %vm296, %v265
  %299 = vst.msk [vmem:[%s3 + $0x8] sm:$0xf] %vm296, %v266
  %300 = vst.msk [vmem:[%s3 + $0xc] sm:$0xf] %vm296, %v267
  %301 = vst.msk [vmem:[%s3 + $0x10] sm:$0xf] %vm296, %v268
  %302 = vst.msk [vmem:[%s3 + $0x14] sm:$0xf] %vm296, %v269
  %303 = vst.msk [vmem:[%s3 + $0x18] sm:$0xf] %vm296, %v270
  %304 = vst.msk [vmem:[%s3 + $0x1c] sm:$0xf] %vm296, %v271
  %305 = vst.msk [vmem:[%s3 + $0x20] sm:$0xf] %vm296, %v272
  %306 = vst.msk [vmem:[%s3 + $0x24] sm:$0xf] %vm296, %v273
  %307 = vst.msk [vmem:[%s3 + $0x28] sm:$0xf] %vm296, %v274
  %308 = vst.msk [vmem:[%s3 + $0x2c] sm:$0xf] %vm296, %v275
  %309 = vst.msk [vmem:[%s3 + $0x30] sm:$0xf] %vm296, %v276
  %310 = vst.msk [vmem:[%s3 + $0x34] sm:$0xf] %vm296, %v277
  %311 = vst.msk [vmem:[%s3 + $0x38] sm:$0xf] %vm296, %v278
  %312 = vst.msk [vmem:[%s3 + $0x3c] sm:$0xf] %vm296, %v279
  // Predicated region
  $region14: #{rpn_forward.12} parent=0 // pred_check
    _
  $region15: #{rpn_forward.12} parent=0 // pred_check_branch
    %314 = sbr.rel (0) target = $region17
  $region16: #{rpn_forward.12} parent=0 // pred_region
    _
  $region17: #{rpn_forward.12} parent=0 // pred_fallthru
    _
  // Predicated region
  $region18: #{rpn_forward.12} parent=0 // pred_check
    _
  $region19: #{rpn_forward.12} parent=0 // pred_check_branch
    %316 = sbr.rel (0) target = $region21
  $region20: #{rpn_forward.12} parent=0 // pred_region
    _
  $region21: #{rpn_forward.12} parent=0 // pred_fallthru
    _

// kernel: rpn_forward.19
$region0: #{rpn_forward.19}
  #allocation0 [shape = 'u32[]', space=smem, size = 0x4, offset = 0x4, fixed_abs, tag = 'smem constant byte address 0x4 - core index']
  #allocation1 [shape = 'u32[144,128]{1,0:T(1,128)}', space=vmem, size = 0x12000, scoped, tag = 'internal scratch']
  %s0 = inlined_call_operand.vmem [shape: bf16[128,96], index: 0, kind: input, shape index: {}]
  %s1 = inlined_call_operand.vmem [shape: bf16[96,22], index: 1, kind: input, shape index: {}]
  %s2 = inlined_call_operand.vmem [shape: f32[1,22], index: 2, kind: input, shape index: {}]
  %s3 = inlined_call_operand.vmem [shape: f32[128,22], index: 3, kind: output, shape index: {}]
  %s4 = sld [smem:[#allocation0]]
  $region22: #{rpn_forward.19} parent=0
    _
  %s6 = ssub.s32 1, %s4
  %s7 = scalar_select 0, %s6, %s4
  // Predicated region
  $region2: #{rpn_forward.19} parent=0 // pred_check
    _
  $region3: #{rpn_forward.19} parent=0 // pred_check_branch
    %9 = sbr.rel (0) target = $region5
  $region4: #{rpn_forward.19} parent=0 // pred_region
    _
  $region5: #{rpn_forward.19} parent=0 // pred_fallthru
    _
  // Predicated region
  $region6: #{rpn_forward.19} parent=0 // pred_check
    _
  $region7: #{rpn_forward.19} parent=0 // pred_check_branch
    %11 = sbr.rel (0) target = $region9
  $region8: #{rpn_forward.19} parent=0 // pred_region
    _
  $region9: #{rpn_forward.19} parent=0 // pred_fallthru
    _
  // Predicated region
  $region10: #{rpn_forward.19} parent=0 // pred_check
    _
  $region11: #{rpn_forward.19} parent=0 // pred_check_branch
    %13 = sbr.rel (0) target = $region13
  $region12: #{rpn_forward.19} parent=0 // pred_region
    _
  $region13: #{rpn_forward.19} parent=0 // pred_fallthru
    _
  %v15 = vld [vmem:[%s0] sm:$0xf]
  %v16 = vld [vmem:[%s0 + $0x4] sm:$0xf]
  %v17 = vld [vmem:[%s0 + $0x8] sm:$0xf]
  %v18 = vld [vmem:[%s0 + $0xc] sm:$0xf]
  %v19 = vld [vmem:[%s0 + $0x10] sm:$0xf]
  %v20 = vld [vmem:[%s0 + $0x14] sm:$0xf]
  %v21 = vld [vmem:[%s0 + $0x18] sm:$0xf]
  %v22 = vld [vmem:[%s0 + $0x1c] sm:$0xf]
  %v23 = vld [vmem:[%s0 + $0x20] sm:$0xf]
  %v24 = vld [vmem:[%s0 + $0x24] sm:$0xf]
  %v25 = vld [vmem:[%s0 + $0x28] sm:$0xf]
  %v26 = vld [vmem:[%s0 + $0x2c] sm:$0xf]
  %v27 = vld [vmem:[%s0 + $0x30] sm:$0xf]
  %v28 = vld [vmem:[%s0 + $0x34] sm:$0xf]
  %v29 = vld [vmem:[%s0 + $0x38] sm:$0xf]
  %v30 = vld [vmem:[%s0 + $0x3c] sm:$0xf]
  %v31 = vld [vmem:[%s1] sm:$0xf]
  %v32 = vld [vmem:[%s1 + $0x4] sm:$0xf]
  %v33 = vld [vmem:[%s1 + $0x8] sm:$0xf]
  %v34 = vld [vmem:[%s1 + $0xc] sm:$0xf]
  %v35 = vld [vmem:[%s1 + $0x10] sm:$0xf]
  %v36 = vld [vmem:[%s1 + $0x14] sm:$0xf]
  %v37 = vld [vmem:[%s1 + $0x18] sm:$0xf]
  %v38 = vld [vmem:[%s1 + $0x1c] sm:$0xf]
  %v39 = vld [vmem:[%s1 + $0x20] sm:$0xf]
  %v40 = vld [vmem:[%s1 + $0x24] sm:$0xf]
  %v41 = vld [vmem:[%s1 + $0x28] sm:$0xf]
  %v42 = vld [vmem:[%s1 + $0x2c] sm:$0xf]
  %v43 = vld [vmem:[%s2] sm:$0x1]
  %v45 = vlaneseq
  %v46 = vshrl.u32 %v45, 7
  %v47 = vsub.s32 0, %v46
  %v48 = vrot.slane %v43, %v47
  %v66 = vunpack.c.l.b16 %v15
  %v67 = vunpack.c.l.b16 %v16
  %v68 = vunpack.c.l.b16 %v17
  %v69 = vunpack.c.l.b16 %v18
  %v70 = vunpack.c.l.b16 %v19
  %v71 = vunpack.c.l.b16 %v20
  %v72 = vunpack.c.l.b16 %v21
  %v73 = vunpack.c.l.b16 %v22
  %v74 = vunpack.c.l.b16 %v23
  %v75 = vunpack.c.l.b16 %v24
  %v76 = vunpack.c.l.b16 %v25
  %v77 = vunpack.c.l.b16 %v26
  %v78 = vunpack.c.l.b16 %v27
  %v79 = vunpack.c.l.b16 %v28
  %v80 = vunpack.c.l.b16 %v29
  %v81 = vunpack.c.l.b16 %v30
  %v82 = vpack.c.b16 %v67, %v66
  %v83 = vpack.c.b16 %v69, %v68
  %v84 = vpack.c.b16 %v71, %v70
  %v85 = vpack.c.b16 %v73, %v72
  %v86 = vpack.c.b16 %v75, %v74
  %v87 = vpack.c.b16 %v77, %v76
  %v88 = vpack.c.b16 %v79, %v78
  %v89 = vpack.c.b16 %v81, %v80
  %v102 = vunpack.c.l.b16 %v31
  %v103 = vunpack.c.l.b16 %v32
  %v104 = vunpack.c.l.b16 %v33
  %v105 = vunpack.c.l.b16 %v34
  %v106 = vunpack.c.l.b16 %v35
  %v107 = vunpack.c.l.b16 %v36
  %v108 = vunpack.c.l.b16 %v37
  %v109 = vunpack.c.l.b16 %v38
  %v110 = vunpack.c.l.b16 %v39
  %v111 = vunpack.c.l.b16 %v40
  %v112 = vunpack.c.l.b16 %v41
  %v113 = vunpack.c.l.b16 %v42
  %v114 = vpack.c.b16 %v103, %v102
  %v115 = vpack.c.b16 %v105, %v104
  %v116 = vpack.c.b16 %v107, %v106
  %v117 = vpack.c.b16 %v109, %v108
  %v118 = vpack.c.b16 %v111, %v110
  %v119 = vpack.c.b16 %v113, %v112
  %vm126 = vcmask 785408
  %v128 = vsel %vm126, %v82, 0
  %v131 = vsel %vm126, %v83, 0
  %v134 = vsel %vm126, %v84, 0
  %v137 = vsel %vm126, %v85, 0
  %v140 = vsel %vm126, %v86, 0
  %v143 = vsel %vm126, %v87, 0
  %v146 = vsel %vm126, %v88, 0
  %v149 = vsel %vm126, %v89, 0
  %151 = vmatprep.subr.bf16.mxu0 0
  %152 = vmatpush1.bf16.msra.mxu0 %v114
  %153 = vmatprep.subr.bf16.mxu0 0
  %154 = vmatpush1.bf16.msra.mxu0 %v115
  %155 = vmatprep.subr.bf16.mxu0 0
  %156 = vmatpush1.bf16.msra.mxu0 %v116
  %157 = vmatprep.subr.bf16.mxu0 0
  %158 = vmatpush1.bf16.msra.mxu0 %v117
  %159 = vmatprep.subr.bf16.mxu0 0
  %160 = vmatpush1.bf16.msra.mxu0 %v118
  %161 = vmatprep.subr.bf16.mxu0 0
  %162 = vmatpush1.bf16.msra.mxu0 %v119
  %163 = vmatprep.subr.bf16.mxu0 0
  %164 = vmatpush1.bf16.msra.mxu0 0
  %165 = vmatprep.subr.bf16.mxu0 0
  %166 = vmatpush1.bf16.msra.mxu0 0
  %167 = vmatprep.subr.bf16.mxu0 0
  %168 = vmatpush1.bf16.msra.mxu0 0
  %169 = vmatprep.subr.bf16.mxu0 0
  %170 = vmatpush1.bf16.msra.mxu0 0
  %171 = vmatprep.subr.bf16.mxu0 0
  %172 = vmatpush1.bf16.msra.mxu0 0
  %173 = vmatprep.subr.bf16.mxu0 0
  %174 = vmatpush1.bf16.msra.mxu0 0
  %175 = vmatprep.subr.bf16.mxu0 0
  %176 = vmatpush1.bf16.msra.mxu0 0
  %177 = vmatprep.subr.bf16.mxu0 0
  %178 = vmatpush1.bf16.msra.mxu0 0
  %179 = vmatprep.subr.bf16.mxu0 0
  %180 = vmatpush1.bf16.msra.mxu0 0
  %181 = vmatprep.subr.bf16.mxu0 0
  %182 = vmatpush1.bf16.msra.mxu0 0
  %183 = vmatprep.mubr.bf16.mxu0 0
  %184 = vmatmul.mubr.bf16.gmra.mrb[0].mxu0 %v128
  %v185 = vpop.f32.mrb[0].mxu0
  %v186 = vadd.f32 %v48, %v185
  %v187 = vpop.f32.mrb[0].mxu0
  %v188 = vpop.f32.mrb[0].mxu0
  %v189 = vadd.f32 %v48, %v188
  %v190 = vpop.f32.mrb[0].mxu0
  %191 = vmatprep.mubr.bf16.mxu0 0
  %192 = vmatmul.mubr.bf16.gmra.mrb[0].mxu0 %v131
  %v193 = vpop.f32.mrb[0].mxu0
  %v194 = vadd.f32 %v48, %v193
  %v195 = vpop.f32.mrb[0].mxu0
  %v196 = vpop.f32.mrb[0].mxu0
  %v197 = vadd.f32 %v48, %v196
  %v198 = vpop.f32.mrb[0].mxu0
  %199 = vmatprep.mubr.bf16.mxu0 0
  %200 = vmatmul.mubr.bf16.gmra.mrb[0].mxu0 %v134
  %v201 = vpop.f32.mrb[0].mxu0
  %v202 = vadd.f32 %v48, %v201
  %v203 = vpop.f32.mrb[0].mxu0
  %v204 = vpop.f32.mrb[0].mxu0
  %v205 = vadd.f32 %v48, %v204
  %v206 = vpop.f32.mrb[0].mxu0
  %207 = vmatprep.mubr.bf16.mxu0 0
  %208 = vmatmul.mubr.bf16.gmra.mrb[0].mxu0 %v137
  %v209 = vpop.f32.mrb[0].mxu0
  %v210 = vadd.f32 %v48, %v209
  %v211 = vpop.f32.mrb[0].mxu0
  %v212 = vpop.f32.mrb[0].mxu0
  %v213 = vadd.f32 %v48, %v212
  %v214 = vpop.f32.mrb[0].mxu0
  %215 = vmatprep.mubr.bf16.mxu0 0
  %216 = vmatmul.mubr.bf16.gmra.mrb[0].mxu0 %v140
  %v217 = vpop.f32.mrb[0].mxu0
  %v218 = vadd.f32 %v48, %v217
  %v219 = vpop.f32.mrb[0].mxu0
  %v220 = vpop.f32.mrb[0].mxu0
  %v221 = vadd.f32 %v48, %v220
  %v222 = vpop.f32.mrb[0].mxu0
  %223 = vmatprep.mubr.bf16.mxu0 0
  %224 = vmatmul.mubr.bf16.gmra.mrb[0].mxu0 %v143
  %v225 = vpop.f32.mrb[0].mxu0
  %v226 = vadd.f32 %v48, %v225
  %v227 = vpop.f32.mrb[0].mxu0
  %v228 = vpop.f32.mrb[0].mxu0
  %v229 = vadd.f32 %v48, %v228
  %v230 = vpop.f32.mrb[0].mxu0
  %231 = vmatprep.mubr.bf16.mxu0 0
  %232 = vmatmul.mubr.bf16.gmra.mrb[0].mxu0 %v146
  %v233 = vpop.f32.mrb[0].mxu0
  %v234 = vadd.f32 %v48, %v233
  %v235 = vpop.f32.mrb[0].mxu0
  %v236 = vpop.f32.mrb[0].mxu0
  %v237 = vadd.f32 %v48, %v236
  %v238 = vpop.f32.mrb[0].mxu0
  %239 = vmatprep.mubr.bf16.mxu0 0
  %240 = vmatmul.mubr.bf16.gmra.mrb[0].mxu0 %v149
  %v241 = vpop.f32.mrb[0].mxu0
  %v242 = vadd.f32 %v48, %v241
  %v243 = vpop.f32.mrb[0].mxu0
  %v244 = vpop.f32.mrb[0].mxu0
  %v245 = vadd.f32 %v48, %v244
  %v246 = vpop.f32.mrb[0].mxu0
  %247 = vdwg.mxu0
  %vm248 = vcmask 179200
  %249 = vst.msk [vmem:[%s3] sm:$0xff] %vm248, %v186
  %250 = vst.msk [vmem:[%s3 + $0x8] sm:$0xff] %vm248, %v189
  %251 = vst.msk [vmem:[%s3 + $0x10] sm:$0xff] %vm248, %v194
  %252 = vst.msk [vmem:[%s3 + $0x18] sm:$0xff] %vm248, %v197
  %253 = vst.msk [vmem:[%s3 + $0x20] sm:$0xff] %vm248, %v202
  %254 = vst.msk [vmem:[%s3 + $0x28] sm:$0xff] %vm248, %v205
  %255 = vst.msk [vmem:[%s3 + $0x30] sm:$0xff] %vm248, %v210
  %256 = vst.msk [vmem:[%s3 + $0x38] sm:$0xff] %vm248, %v213
  %257 = vst.msk [vmem:[%s3 + $0x40] sm:$0xff] %vm248, %v218
  %258 = vst.msk [vmem:[%s3 + $0x48] sm:$0xff] %vm248, %v221
  %259 = vst.msk [vmem:[%s3 + $0x50] sm:$0xff] %vm248, %v226
  %260 = vst.msk [vmem:[%s3 + $0x58] sm:$0xff] %vm248, %v229
  %261 = vst.msk [vmem:[%s3 + $0x60] sm:$0xff] %vm248, %v234
  %262 = vst.msk [vmem:[%s3 + $0x68] sm:$0xff] %vm248, %v237
  %263 = vst.msk [vmem:[%s3 + $0x70] sm:$0xff] %vm248, %v242
  %264 = vst.msk [vmem:[%s3 + $0x78] sm:$0xff] %vm248, %v245
  // Predicated region
  $region14: #{rpn_forward.19} parent=0 // pred_check
    _
  $region15: #{rpn_forward.19} parent=0 // pred_check_branch
    %266 = sbr.rel (0) target = $region17
  $region16: #{rpn_forward.19} parent=0 // pred_region
    _
  $region17: #{rpn_forward.19} parent=0 // pred_fallthru
    _
  // Predicated region
  $region18: #{rpn_forward.19} parent=0 // pred_check
    _
  $region19: #{rpn_forward.19} parent=0 // pred_check_branch
    %268 = sbr.rel (0) target = $region21
  $region20: #{rpn_forward.19} parent=0 // pred_region
    _
  $region21: #{rpn_forward.19} parent=0 // pred_fallthru
    _

</llo_original>
